<compile_context>
chip_gen: v6e
topology: v6e:2x2x1
jax: 0.10.0
libtpu: 0.0.40
codegen_flags: <defaults>
</compile_context>

<pallas_src>
import functools

import jax
import jax.numpy as jnp
from jax.experimental import pallas as pl
from jax.experimental.pallas import tpu as pltpu


def _res_block_kernel(xc_ref, xt_ref, xb_ref, w_ref, b_ref, o_ref, col_ref,
                      *, TH, W, C):
    # xc_ref:  (1, TH, W, C)   center strip (conv1 input rows + residual)
    # xt_ref:  (1, 2, W, C)    top halo rows s*TH-2, s*TH-1 (garbage at s==0)
    # xb_ref:  (1, 2, W, C)    bottom halo rows s*TH+TH, +1 (garbage at s==last)
    # w_ref:   (3, 3C, C) bf16 w_ref[dy, dx*C + ci, co] == W[dy, dx, ci, co]
    # b_ref:   (1, C) f32      conv bias (shared by both conv applications)
    # o_ref:   (1, TH, W, C)   output strip
    # col_ref: (TH+4, W, 3C) bf16  im2col-along-W scratch (reused by both convs)
    f32 = jnp.float32
    bf16 = jnp.bfloat16
    s = pl.program_id(1)
    n_strips = pl.num_programs(1)

    xc = xc_ref[0].astype(f32)              # (TH, W, C): conv1 center + residual
    bias = b_ref[...].astype(f32)           # (1, C), hoisted once per step

    def build_cols(row0, v):
        # v: (nrows, W, C).  Write the three dx-shifted planes (zero W borders
        # baked in via concat) into col rows [row0, row0+nrows).  All scratch
        # stores are full-width along W; lane offsets select the dx plane.
        v = v.astype(bf16)
        nrows = v.shape[0]
        zc = jnp.zeros((nrows, 1, C), bf16)
        rows = pl.ds(row0, nrows)
        col_ref[rows, pl.ds(0, W), pl.ds(C, C)] = v                              # dx=1
        col_ref[rows, pl.ds(0, W), pl.ds(0, C)] = jnp.concatenate(
            [zc, v[:, :W - 1, :]], axis=1)                                       # dx=0
        col_ref[rows, pl.ds(0, W), pl.ds(2 * C, C)] = jnp.concatenate(
            [v[:, 1:, :], zc], axis=1)                                           # dx=2

    def conv3x3(m_rows):
        # out[j*W + w, co] = sum_dy col[j+dy, w, :] . w[dy, :, co], j in [0, m_rows)
        # 3 MXU matmuls, M = m_rows*W, K = 3C, bf16 operands, f32 accumulation.
        taps0 = col_ref[pl.ds(0, m_rows)].reshape(m_rows * W, 3 * C)
        acc = jnp.dot(taps0, w_ref[0], preferred_element_type=f32)
        for dy in (1, 2):                       # static unroll
            taps = col_ref[pl.ds(dy, m_rows)].reshape(m_rows * W, 3 * C)
            acc = acc + jnp.dot(taps, w_ref[dy], preferred_element_type=f32)
        return acc + bias                       # (m_rows*W, C) f32

    # ---- conv1 over the extended strip: image rows s*TH-2 .. s*TH+TH+1 ----------
    # col rows: [0,2) top halo | [2, TH+2) center | [TH+2, TH+4) bottom halo
    @pl.when(s == 0)
    def _():                                    # image rows -2,-1 -> zero pad
        col_ref[pl.ds(0, 2)] = jnp.zeros((2, W, 3 * C), bf16)

    @pl.when(s > 0)
    def _():                                    # real neighbor rows
        build_cols(0, xt_ref[0])

    build_cols(2, xc)

    @pl.when(s == n_strips - 1)
    def _():                                    # image rows H, H+1 -> zero pad
        col_ref[pl.ds(TH + 2, 2)] = jnp.zeros((2, W, 3 * C), bf16)

    @pl.when(s < n_strips - 1)
    def _():
        build_cols(TH + 2, xb_ref[0])

    # y1 covers image rows s*TH-1 .. s*TH+TH  (TH+2 rows, incl. 1-row conv2 halo)
    y1 = jnp.maximum(conv3x3(TH + 2), 0.0).reshape(TH + 2, W, C)

    # ---- conv2 over the center strip --------------------------------------------
    build_cols(0, y1)                           # col rows [0, TH+2) = y1

    # conv2's SAME zero padding at the image top/bottom (NOT at interior seams):
    @pl.when(s == 0)
    def _():
        col_ref[pl.ds(0, 1)] = jnp.zeros((1, W, 3 * C), bf16)

    @pl.when(s == n_strips - 1)
    def _():
        col_ref[pl.ds(TH + 1, 1)] = jnp.zeros((1, W, 3 * C), bf16)

    y2 = conv3x3(TH).reshape(TH, W, C)
    o_ref[0] = (y2 * 0.1 + xc).astype(o_ref.dtype)


def _strip_footprint_bytes(th, W, C):
    # bf16 im2col scratch + double-buffered f32 in/out strips + f32 intermediates.
    return ((th + 4) * W * 3 * C * 2
            + 4 * th * W * C * 4
            + 4 * (th + 2) * W * C * 4
            + 2 * 3 * 3 * C * C * 2)


def _choose_tile_h(H, W, C, budget_bytes=24 << 20):
    """Largest even divisor of H whose per-strip VMEM footprint fits the budget."""
    best = None
    for th in range(2, H + 1, 2):
        if H % th:
            continue
        if _strip_footprint_bytes(th, W, C) <= budget_bytes:
            best = th
    return best if best is not None else 2


def res_block_nhwc(x_nhwc, w_hwio, bias, *, tile_h=None):
    """EDSR residual block, NHWC activations (no layout transposes on the hot path).

    y = relu(conv3x3(x)); y = conv3x3(y); out = 0.1*y + x  (same weight/bias twice)
    x_nhwc: (N, H, W, C); w_hwio: (3, 3, C, C); bias: (C,). Returns (N, H, W, C).
    """
    N, H, W, C = x_nhwc.shape
    assert w_hwio.shape == (3, 3, C, C) and bias.shape == (C,)
    assert H % 2 == 0, "H must be even (halo rows are fetched as 2-row blocks)"

    TH = tile_h if tile_h is not None else _choose_tile_h(H, W, C)
    assert H % TH == 0 and TH % 2 == 0, "tile_h must be an even divisor of H"
    n_strips = H // TH
    hb = TH // 2                                # halo block index stride (blocks of 2 rows)

    # Per-dy weight panels with K = 3C:  wk[dy, dx*C + ci, co] = w[dy, dx, ci, co]
    wk = w_hwio.reshape(3, 3 * C, C).astype(jnp.bfloat16)
    b2 = bias.reshape(1, C).astype(jnp.float32)

    kernel = functools.partial(_res_block_kernel, TH=TH, W=W, C=C)

    est = _strip_footprint_bytes(TH, W, C)
    vmem_limit = int(min(48 * 1024 * 1024, max(32 * 1024 * 1024, 2 * est)))

    out = pl.pallas_call(
        kernel,
        out_shape=jax.ShapeDtypeStruct((N, H, W, C), x_nhwc.dtype),
        grid_spec=pltpu.PrefetchScalarGridSpec(
            num_scalar_prefetch=0,
            grid=(N, n_strips),
            in_specs=[
                # center strip (conv input + residual)
                pl.BlockSpec((1, TH, W, C), lambda n, s: (n, s, 0, 0)),
                # 2-row top halo: image rows s*TH-2, s*TH-1 (clamped; zeroed in-kernel at s==0)
                pl.BlockSpec((1, 2, W, C),
                             lambda n, s: (n, jnp.maximum(s * hb - 1, 0), 0, 0)),
                # 2-row bottom halo: image rows s*TH+TH, +1 (clamped; zeroed in-kernel at s==last)
                pl.BlockSpec((1, 2, W, C),
                             lambda n, s: (n, jnp.minimum((s + 1) * hb, H // 2 - 1), 0, 0)),
                pl.BlockSpec((3, 3 * C, C), lambda n, s: (0, 0, 0)),
                pl.BlockSpec((1, C), lambda n, s: (0, 0)),
            ],
            out_specs=pl.BlockSpec((1, TH, W, C), lambda n, s: (n, s, 0, 0)),
            scratch_shapes=[pltpu.VMEM((TH + 4, W, 3 * C), jnp.bfloat16)],
        ),
        compiler_params=pltpu.CompilerParams(
            dimension_semantics=("parallel", "parallel"),
            vmem_limit_bytes=vmem_limit,
        ),
    )(x_nhwc, x_nhwc, x_nhwc, wk, b2)
    return out


def res_block_nchw(x_nchw, w_hwio, bias, *, tile_h=None):
    """Drop-in NCHW adapter for parity with the PyTorch module. Prefer keeping the
    surrounding model NHWC and calling res_block_nhwc directly (avoids the two
    full-activation HBM round-trips these transposes cost)."""
    x = jnp.transpose(x_nchw, (0, 2, 3, 1))
    y = res_block_nhwc(x, w_hwio, bias, tile_h=tile_h)
    return jnp.transpose(y, (0, 3, 1, 2))


def _reference_res_block_nhwc(x, w_hwio, bias):
    # Pure-JAX reference (matches the PyTorch forward; f32 throughout, NHWC layout).
    def conv(z):
        out = jax.lax.conv_general_dilated(
            z, w_hwio, window_strides=(1, 1), padding="SAME",
            dimension_numbers=("NHWC", "HWIO", "NHWC"))
        return out + bias.reshape(1, 1, 1, -1)

    y = jax.nn.relu(conv(x))
    y = conv(y)
    return y * 0.1 + x


if __name__ == "__main__":
    # Small shapes consistent with the module (n_feat=256 scaled down to 32).
    N, C, H, W = 2, 32, 16, 16

    key = jax.random.PRNGKey(0)
    k_w, k_b, k_x = jax.random.split(key, 3)
    w = jax.random.normal(k_w, (3, 3, C, C), jnp.float32) * 0.05   # HWIO
    b = jax.random.normal(k_b, (C,), jnp.float32) * 0.05
    x = jax.random.normal(k_x, (N, H, W, C), jnp.float32)          # NHWC

    ref = jax.block_until_ready(_reference_res_block_nhwc(x, w, b))

    # Multi-strip path (4 strips: exercises zero-padded edges AND interior halo seams).
    out = jax.block_until_ready(res_block_nhwc(x, w, b, tile_h=4))
    assert out.shape == x.shape and out.dtype == x.dtype
    # bf16 MXU operands (intentional perf choice) -> slightly looser than pure f32.
    assert jnp.allclose(out, ref, rtol=5e-3, atol=5e-3), "mismatch vs reference (tile_h=4)"

    # Auto-chosen strip size (single strip at this size: both boundary paths in one step).
    out2 = jax.block_until_ready(res_block_nhwc(x, w, b))
    assert jnp.allclose(out2, ref, rtol=5e-3, atol=5e-3), "mismatch vs reference (auto tile)"

    print("KERNEL_OK")
</pallas_src>

<mosaic_0001>
module attributes {stable_mosaic.version = 11 : i64} {
  func.func @_res_block_kernel(%arg0: i32, %arg1: i32, %arg2: memref<1x4x16x32xf32, #tpu.memory_space<vmem>>, %arg3: memref<1x2x16x32xf32, #tpu.memory_space<vmem>>, %arg4: memref<1x2x16x32xf32, #tpu.memory_space<vmem>>, %arg5: memref<3x96x32xbf16, #tpu.memory_space<vmem>>, %arg6: memref<1x32xf32, #tpu.memory_space<vmem>>, %arg7: memref<1x4x16x32xf32, #tpu.memory_space<vmem>>, %arg8: memref<8x16x96xbf16, #tpu.memory_space<vmem>>) attributes {dimension_semantics = [#tpu.dimension_semantics<parallel>, #tpu.dimension_semantics<parallel>], iteration_bounds = array<i64: 2, 4>, scalar_prefetch = 0 : i64, scratch_operands = 1 : i64, tpu.core_type = #tpu.core_type<tc>, window_params = [{transform_indices = @transform_0, window_bounds = array<i64: 1, 4, 16, 32>}, {transform_indices = @transform_1, window_bounds = array<i64: 1, 2, 16, 32>}, {transform_indices = @transform_2, window_bounds = array<i64: 1, 2, 16, 32>}, {pipeline_mode = #tpu.pipeline_mode<synchronous>, transform_indices = @transform_3, window_bounds = array<i64: 3, 96, 32>}, {pipeline_mode = #tpu.pipeline_mode<synchronous>, transform_indices = @transform_4, window_bounds = array<i64: 1, 32>}, {transform_indices = @transform_5, window_bounds = array<i64: 1, 4, 16, 32>}]} {
    %c0 = arith.constant 0 : index
    %c0_0 = arith.constant 0 : index
    %c0_1 = arith.constant 0 : index
    %c0_2 = arith.constant 0 : index
    %0 = vector.load %arg2[%c0, %c0_0, %c0_1, %c0_2] : memref<1x4x16x32xf32, #tpu.memory_space<vmem>>, vector<1x4x16x32xf32>
    %1 = vector.shape_cast %0 : vector<1x4x16x32xf32> to vector<4x16x32xf32>
    %c0_3 = arith.constant 0 : index
    %c0_4 = arith.constant 0 : index
    %2 = vector.load %arg6[%c0_3, %c0_4] : memref<1x32xf32, #tpu.memory_space<vmem>>, vector<1x32xf32>
    %c0_i32 = arith.constant 0 : i32
    %3 = arith.cmpi eq, %arg1, %c0_i32 : i32
    %4 = arith.extui %3 : i1 to i32
    %c0_i32_5 = arith.constant 0 : i32
    %5 = arith.cmpi ne, %4, %c0_i32_5 : i32
    scf.if %5 {
      %cst_78 = arith.constant 0.000000e+00 : bf16
      %87 = vector.broadcast %cst_78 : bf16 to vector<2x16x96xbf16>
      %c0_79 = arith.constant 0 : index
      %c0_80 = arith.constant 0 : index
      %c0_81 = arith.constant 0 : index
      %88 = vector.load %arg8[%c0_79, %c0_80, %c0_81] : memref<8x16x96xbf16, #tpu.memory_space<vmem>>, vector<2x16x96xbf16>
      tpu.vector_store %arg8[%c0_79, %c0_80, %c0_81], %87 {strides = array<i32>} : memref<8x16x96xbf16, #tpu.memory_space<vmem>>, vector<2x16x96xbf16>,
    } else {
    }
    %c0_i32_6 = arith.constant 0 : i32
    %6 = arith.cmpi sgt, %arg1, %c0_i32_6 : i32
    %7 = arith.extui %6 : i1 to i32
    %c0_i32_7 = arith.constant 0 : i32
    %8 = arith.cmpi ne, %7, %c0_i32_7 : i32
    scf.if %8 {
      %c0_78 = arith.constant 0 : index
      %c0_79 = arith.constant 0 : index
      %c0_80 = arith.constant 0 : index
      %c0_81 = arith.constant 0 : index
      %87 = vector.load %arg3[%c0_78, %c0_79, %c0_80, %c0_81] : memref<1x2x16x32xf32, #tpu.memory_space<vmem>>, vector<1x2x16x32xf32>
      %88 = vector.shape_cast %87 : vector<1x2x16x32xf32> to vector<2x16x32xf32>
      %89 = arith.truncf %88 : vector<2x16x32xf32> to vector<2x16x32xbf16>
      %cst_82 = arith.constant 0.000000e+00 : bf16
      %90 = vector.broadcast %cst_82 : bf16 to vector<2x1x32xbf16>
      %c0_83 = arith.constant 0 : index
      %c0_84 = arith.constant 0 : index
      %c32_85 = arith.constant 32 : index
      %91 = vector.load %arg8[%c0_83, %c0_84, %c32_85] : memref<8x16x96xbf16, #tpu.memory_space<vmem>>, vector<2x16x32xbf16>
      tpu.vector_store %arg8[%c0_83, %c0_84, %c32_85], %89 {strides = array<i32>} : memref<8x16x96xbf16, #tpu.memory_space<vmem>>, vector<2x16x32xbf16>,
      %92 = vector.extract_strided_slice %89 {offsets = [0, 0, 0], sizes = [2, 15, 32], strides = [1, 1, 1]} : vector<2x16x32xbf16> to vector<2x15x32xbf16>
      %93 = tpu.concatenate %90, %92 in 1 : vector<2x1x32xbf16>, vector<2x15x32xbf16> -> vector<2x16x32xbf16>
      %c0_86 = arith.constant 0 : index
      %c0_87 = arith.constant 0 : index
      %c0_88 = arith.constant 0 : index
      %94 = vector.load %arg8[%c0_86, %c0_87, %c0_88] : memref<8x16x96xbf16, #tpu.memory_space<vmem>>, vector<2x16x32xbf16>
      tpu.vector_store %arg8[%c0_86, %c0_87, %c0_88], %93 {strides = array<i32>} : memref<8x16x96xbf16, #tpu.memory_space<vmem>>, vector<2x16x32xbf16>,
      %95 = vector.extract_strided_slice %89 {offsets = [0, 1, 0], sizes = [2, 15, 32], strides = [1, 1, 1]} : vector<2x16x32xbf16> to vector<2x15x32xbf16>
      %96 = tpu.concatenate %95, %90 in 1 : vector<2x15x32xbf16>, vector<2x1x32xbf16> -> vector<2x16x32xbf16>
      %c0_89 = arith.constant 0 : index
      %c0_90 = arith.constant 0 : index
      %c64_91 = arith.constant 64 : index
      %97 = vector.load %arg8[%c0_89, %c0_90, %c64_91] : memref<8x16x96xbf16, #tpu.memory_space<vmem>>, vector<2x16x32xbf16>
      tpu.vector_store %arg8[%c0_89, %c0_90, %c64_91], %96 {strides = array<i32>} : memref<8x16x96xbf16, #tpu.memory_space<vmem>>, vector<2x16x32xbf16>,
    } else {
    }
    %9 = arith.truncf %1 : vector<4x16x32xf32> to vector<4x16x32xbf16>
    %cst = arith.constant 0.000000e+00 : bf16
    %10 = vector.broadcast %cst : bf16 to vector<4x1x32xbf16>
    %c2 = arith.constant 2 : index
    %c0_8 = arith.constant 0 : index
    %c32 = arith.constant 32 : index
    %11 = vector.load %arg8[%c2, %c0_8, %c32] : memref<8x16x96xbf16, #tpu.memory_space<vmem>>, vector<4x16x32xbf16>
    tpu.vector_store %arg8[%c2, %c0_8, %c32], %9 {strides = array<i32>} : memref<8x16x96xbf16, #tpu.memory_space<vmem>>, vector<4x16x32xbf16>,
    %12 = vector.extract_strided_slice %9 {offsets = [0, 0, 0], sizes = [4, 15, 32], strides = [1, 1, 1]} : vector<4x16x32xbf16> to vector<4x15x32xbf16>
    %13 = tpu.concatenate %10, %12 in 1 : vector<4x1x32xbf16>, vector<4x15x32xbf16> -> vector<4x16x32xbf16>
    %c2_9 = arith.constant 2 : index
    %c0_10 = arith.constant 0 : index
    %c0_11 = arith.constant 0 : index
    %14 = vector.load %arg8[%c2_9, %c0_10, %c0_11] : memref<8x16x96xbf16, #tpu.memory_space<vmem>>, vector<4x16x32xbf16>
    tpu.vector_store %arg8[%c2_9, %c0_10, %c0_11], %13 {strides = array<i32>} : memref<8x16x96xbf16, #tpu.memory_space<vmem>>, vector<4x16x32xbf16>,
    %15 = vector.extract_strided_slice %9 {offsets = [0, 1, 0], sizes = [4, 15, 32], strides = [1, 1, 1]} : vector<4x16x32xbf16> to vector<4x15x32xbf16>
    %16 = tpu.concatenate %15, %10 in 1 : vector<4x15x32xbf16>, vector<4x1x32xbf16> -> vector<4x16x32xbf16>
    %c2_12 = arith.constant 2 : index
    %c0_13 = arith.constant 0 : index
    %c64 = arith.constant 64 : index
    %17 = vector.load %arg8[%c2_12, %c0_13, %c64] : memref<8x16x96xbf16, #tpu.memory_space<vmem>>, vector<4x16x32xbf16>
    tpu.vector_store %arg8[%c2_12, %c0_13, %c64], %16 {strides = array<i32>} : memref<8x16x96xbf16, #tpu.memory_space<vmem>>, vector<4x16x32xbf16>,
    %c3_i32 = arith.constant 3 : i32
    %18 = arith.cmpi eq, %arg1, %c3_i32 : i32
    %19 = arith.extui %18 : i1 to i32
    %c0_i32_14 = arith.constant 0 : i32
    %20 = arith.cmpi ne, %19, %c0_i32_14 : i32
    scf.if %20 {
      %cst_78 = arith.constant 0.000000e+00 : bf16
      %87 = vector.broadcast %cst_78 : bf16 to vector<2x16x96xbf16>
      %c6 = arith.constant 6 : index
      %c0_79 = arith.constant 0 : index
      %c0_80 = arith.constant 0 : index
      %88 = vector.load %arg8[%c6, %c0_79, %c0_80] : memref<8x16x96xbf16, #tpu.memory_space<vmem>>, vector<2x16x96xbf16>
      tpu.vector_store %arg8[%c6, %c0_79, %c0_80], %87 {strides = array<i32>} : memref<8x16x96xbf16, #tpu.memory_space<vmem>>, vector<2x16x96xbf16>,
    } else {
    }
    %c3_i32_15 = arith.constant 3 : i32
    %21 = arith.cmpi slt, %arg1, %c3_i32_15 : i32
    %22 = arith.extui %21 : i1 to i32
    %c0_i32_16 = arith.constant 0 : i32
    %23 = arith.cmpi ne, %22, %c0_i32_16 : i32
    scf.if %23 {
      %c0_78 = arith.constant 0 : index
      %c0_79 = arith.constant 0 : index
      %c0_80 = arith.constant 0 : index
      %c0_81 = arith.constant 0 : index
      %87 = vector.load %arg4[%c0_78, %c0_79, %c0_80, %c0_81] : memref<1x2x16x32xf32, #tpu.memory_space<vmem>>, vector<1x2x16x32xf32>
      %88 = vector.shape_cast %87 : vector<1x2x16x32xf32> to vector<2x16x32xf32>
      %89 = arith.truncf %88 : vector<2x16x32xf32> to vector<2x16x32xbf16>
      %cst_82 = arith.constant 0.000000e+00 : bf16
      %90 = vector.broadcast %cst_82 : bf16 to vector<2x1x32xbf16>
      %c6 = arith.constant 6 : index
      %c0_83 = arith.constant 0 : index
      %c32_84 = arith.constant 32 : index
      %91 = vector.load %arg8[%c6, %c0_83, %c32_84] : memref<8x16x96xbf16, #tpu.memory_space<vmem>>, vector<2x16x32xbf16>
      tpu.vector_store %arg8[%c6, %c0_83, %c32_84], %89 {strides = array<i32>} : memref<8x16x96xbf16, #tpu.memory_space<vmem>>, vector<2x16x32xbf16>,
      %92 = vector.extract_strided_slice %89 {offsets = [0, 0, 0], sizes = [2, 15, 32], strides = [1, 1, 1]} : vector<2x16x32xbf16> to vector<2x15x32xbf16>
      %93 = tpu.concatenate %90, %92 in 1 : vector<2x1x32xbf16>, vector<2x15x32xbf16> -> vector<2x16x32xbf16>
      %c6_85 = arith.constant 6 : index
      %c0_86 = arith.constant 0 : index
      %c0_87 = arith.constant 0 : index
      %94 = vector.load %arg8[%c6_85, %c0_86, %c0_87] : memref<8x16x96xbf16, #tpu.memory_space<vmem>>, vector<2x16x32xbf16>
      tpu.vector_store %arg8[%c6_85, %c0_86, %c0_87], %93 {strides = array<i32>} : memref<8x16x96xbf16, #tpu.memory_space<vmem>>, vector<2x16x32xbf16>,
      %95 = vector.extract_strided_slice %89 {offsets = [0, 1, 0], sizes = [2, 15, 32], strides = [1, 1, 1]} : vector<2x16x32xbf16> to vector<2x15x32xbf16>
      %96 = tpu.concatenate %95, %90 in 1 : vector<2x15x32xbf16>, vector<2x1x32xbf16> -> vector<2x16x32xbf16>
      %c6_88 = arith.constant 6 : index
      %c0_89 = arith.constant 0 : index
      %c64_90 = arith.constant 64 : index
      %97 = vector.load %arg8[%c6_88, %c0_89, %c64_90] : memref<8x16x96xbf16, #tpu.memory_space<vmem>>, vector<2x16x32xbf16>
      tpu.vector_store %arg8[%c6_88, %c0_89, %c64_90], %96 {strides = array<i32>} : memref<8x16x96xbf16, #tpu.memory_space<vmem>>, vector<2x16x32xbf16>,
    } else {
    }
    %c0_17 = arith.constant 0 : index
    %c0_18 = arith.constant 0 : index
    %c0_19 = arith.constant 0 : index
    %24 = vector.load %arg8[%c0_17, %c0_18, %c0_19] : memref<8x16x96xbf16, #tpu.memory_space<vmem>>, vector<6x16x96xbf16>
    %25 = vector.shape_cast %24 : vector<6x16x96xbf16> to vector<96x96xbf16>
    %c0_20 = arith.constant 0 : index
    %c0_21 = arith.constant 0 : index
    %c0_22 = arith.constant 0 : index
    %26 = vector.load %arg5[%c0_20, %c0_21, %c0_22] : memref<3x96x32xbf16, #tpu.memory_space<vmem>>, vector<1x96x32xbf16>
    %27 = vector.shape_cast %26 : vector<1x96x32xbf16> to vector<96x32xbf16>
    %cst_23 = arith.constant dense<0.000000e+00> : vector<96x32xf32>
    %28 = tpu.matmul %25, %27, %cst_23 {dimension_numbers = #tpu.dot_dimension_numbers<[1], [0], [0], [1], [0, 0, 1, 1], [], []>} : vector<96x96xbf16>, vector<96x32xbf16>, vector<96x32xf32> -> vector<96x32xf32>
    %c1 = arith.constant 1 : index
    %c0_24 = arith.constant 0 : index
    %c0_25 = arith.constant 0 : index
    %29 = vector.load %arg8[%c1, %c0_24, %c0_25] : memref<8x16x96xbf16, #tpu.memory_space<vmem>>, vector<6x16x96xbf16>
    %30 = vector.shape_cast %29 : vector<6x16x96xbf16> to vector<96x96xbf16>
    %c1_26 = arith.constant 1 : index
    %c0_27 = arith.constant 0 : index
    %c0_28 = arith.constant 0 : index
    %31 = vector.load %arg5[%c1_26, %c0_27, %c0_28] : memref<3x96x32xbf16, #tpu.memory_space<vmem>>, vector<1x96x32xbf16>
    %32 = vector.shape_cast %31 : vector<1x96x32xbf16> to vector<96x32xbf16>
    %cst_29 = arith.constant dense<0.000000e+00> : vector<96x32xf32>
    %33 = tpu.matmul %30, %32, %cst_29 {dimension_numbers = #tpu.dot_dimension_numbers<[1], [0], [0], [1], [0, 0, 1, 1], [], []>} : vector<96x96xbf16>, vector<96x32xbf16>, vector<96x32xf32> -> vector<96x32xf32>
    %34 = arith.addf %28, %33 : vector<96x32xf32>
    %c2_30 = arith.constant 2 : index
    %c0_31 = arith.constant 0 : index
    %c0_32 = arith.constant 0 : index
    %35 = vector.load %arg8[%c2_30, %c0_31, %c0_32] : memref<8x16x96xbf16, #tpu.memory_space<vmem>>, vector<6x16x96xbf16>
    %36 = vector.shape_cast %35 : vector<6x16x96xbf16> to vector<96x96xbf16>
    %c2_33 = arith.constant 2 : index
    %c0_34 = arith.constant 0 : index
    %c0_35 = arith.constant 0 : index
    %37 = vector.load %arg5[%c2_33, %c0_34, %c0_35] : memref<3x96x32xbf16, #tpu.memory_space<vmem>>, vector<1x96x32xbf16>
    %38 = vector.shape_cast %37 : vector<1x96x32xbf16> to vector<96x32xbf16>
    %cst_36 = arith.constant dense<0.000000e+00> : vector<96x32xf32>
    %39 = tpu.matmul %36, %38, %cst_36 {dimension_numbers = #tpu.dot_dimension_numbers<[1], [0], [0], [1], [0, 0, 1, 1], [], []>} : vector<96x96xbf16>, vector<96x32xbf16>, vector<96x32xf32> -> vector<96x32xf32>
    %40 = arith.addf %34, %39 : vector<96x32xf32>
    %41 = vector.broadcast %2 : vector<1x32xf32> to vector<96x32xf32>
    %42 = arith.addf %40, %41 : vector<96x32xf32>
    %cst_37 = arith.constant 0.000000e+00 : f32
    %43 = vector.broadcast %cst_37 : f32 to vector<96x32xf32>
    %44 = arith.maximumf %42, %43 : vector<96x32xf32>
    %45 = vector.shape_cast %44 : vector<96x32xf32> to vector<6x16x32xf32>
    %46 = arith.truncf %45 : vector<6x16x32xf32> to vector<6x16x32xbf16>
    %cst_38 = arith.constant 0.000000e+00 : bf16
    %47 = vector.broadcast %cst_38 : bf16 to vector<6x1x32xbf16>
    %c0_39 = arith.constant 0 : index
    %c0_40 = arith.constant 0 : index
    %c32_41 = arith.constant 32 : index
    %48 = vector.load %arg8[%c0_39, %c0_40, %c32_41] : memref<8x16x96xbf16, #tpu.memory_space<vmem>>, vector<6x16x32xbf16>
    tpu.vector_store %arg8[%c0_39, %c0_40, %c32_41], %46 {strides = array<i32>} : memref<8x16x96xbf16, #tpu.memory_space<vmem>>, vector<6x16x32xbf16>,
    %49 = vector.extract_strided_slice %46 {offsets = [0, 0, 0], sizes = [6, 15, 32], strides = [1, 1, 1]} : vector<6x16x32xbf16> to vector<6x15x32xbf16>
    %50 = tpu.concatenate %47, %49 in 1 : vector<6x1x32xbf16>, vector<6x15x32xbf16> -> vector<6x16x32xbf16>
    %c0_42 = arith.constant 0 : index
    %c0_43 = arith.constant 0 : index
    %c0_44 = arith.constant 0 : index
    %51 = vector.load %arg8[%c0_42, %c0_43, %c0_44] : memref<8x16x96xbf16, #tpu.memory_space<vmem>>, vector<6x16x32xbf16>
    tpu.vector_store %arg8[%c0_42, %c0_43, %c0_44], %50 {strides = array<i32>} : memref<8x16x96xbf16, #tpu.memory_space<vmem>>, vector<6x16x32xbf16>,
    %52 = vector.extract_strided_slice %46 {offsets = [0, 1, 0], sizes = [6, 15, 32], strides = [1, 1, 1]} : vector<6x16x32xbf16> to vector<6x15x32xbf16>
    %53 = tpu.concatenate %52, %47 in 1 : vector<6x15x32xbf16>, vector<6x1x32xbf16> -> vector<6x16x32xbf16>
    %c0_45 = arith.constant 0 : index
    %c0_46 = arith.constant 0 : index
    %c64_47 = arith.constant 64 : index
    %54 = vector.load %arg8[%c0_45, %c0_46, %c64_47] : memref<8x16x96xbf16, #tpu.memory_space<vmem>>, vector<6x16x32xbf16>
    tpu.vector_store %arg8[%c0_45, %c0_46, %c64_47], %53 {strides = array<i32>} : memref<8x16x96xbf16, #tpu.memory_space<vmem>>, vector<6x16x32xbf16>,
    %c0_i32_48 = arith.constant 0 : i32
    %55 = arith.cmpi eq, %arg1, %c0_i32_48 : i32
    %56 = arith.extui %55 : i1 to i32
    %c0_i32_49 = arith.constant 0 : i32
    %57 = arith.cmpi ne, %56, %c0_i32_49 : i32
    scf.if %57 {
      %cst_78 = arith.constant 0.000000e+00 : bf16
      %87 = vector.broadcast %cst_78 : bf16 to vector<1x16x96xbf16>
      %c0_79 = arith.constant 0 : index
      %c0_80 = arith.constant 0 : index
      %c0_81 = arith.constant 0 : index
      %88 = vector.load %arg8[%c0_79, %c0_80, %c0_81] : memref<8x16x96xbf16, #tpu.memory_space<vmem>>, vector<1x16x96xbf16>
      tpu.vector_store %arg8[%c0_79, %c0_80, %c0_81], %87 {strides = array<i32>} : memref<8x16x96xbf16, #tpu.memory_space<vmem>>, vector<1x16x96xbf16>,
    } else {
    }
    %c3_i32_50 = arith.constant 3 : i32
    %58 = arith.cmpi eq, %arg1, %c3_i32_50 : i32
    %59 = arith.extui %58 : i1 to i32
    %c0_i32_51 = arith.constant 0 : i32
    %60 = arith.cmpi ne, %59, %c0_i32_51 : i32
    scf.if %60 {
      %cst_78 = arith.constant 0.000000e+00 : bf16
      %87 = vector.broadcast %cst_78 : bf16 to vector<1x16x96xbf16>
      %c5 = arith.constant 5 : index
      %c0_79 = arith.constant 0 : index
      %c0_80 = arith.constant 0 : index
      %88 = vector.load %arg8[%c5, %c0_79, %c0_80] : memref<8x16x96xbf16, #tpu.memory_space<vmem>>, vector<1x16x96xbf16>
      tpu.vector_store %arg8[%c5, %c0_79, %c0_80], %87 {strides = array<i32>} : memref<8x16x96xbf16, #tpu.memory_space<vmem>>, vector<1x16x96xbf16>,
    } else {
    }
    %c0_52 = arith.constant 0 : index
    %c0_53 = arith.constant 0 : index
    %c0_54 = arith.constant 0 : index
    %61 = vector.load %arg8[%c0_52, %c0_53, %c0_54] : memref<8x16x96xbf16, #tpu.memory_space<vmem>>, vector<4x16x96xbf16>
    %62 = vector.shape_cast %61 : vector<4x16x96xbf16> to vector<64x96xbf16>
    %c0_55 = arith.constant 0 : index
    %c0_56 = arith.constant 0 : index
    %c0_57 = arith.constant 0 : index
    %63 = vector.load %arg5[%c0_55, %c0_56, %c0_57] : memref<3x96x32xbf16, #tpu.memory_space<vmem>>, vector<1x96x32xbf16>
    %64 = vector.shape_cast %63 : vector<1x96x32xbf16> to vector<96x32xbf16>
    %cst_58 = arith.constant dense<0.000000e+00> : vector<64x32xf32>
    %65 = tpu.matmul %62, %64, %cst_58 {dimension_numbers = #tpu.dot_dimension_numbers<[1], [0], [0], [1], [0, 0, 1, 1], [], []>} : vector<64x96xbf16>, vector<96x32xbf16>, vector<64x32xf32> -> vector<64x32xf32>
    %c1_59 = arith.constant 1 : index
    %c0_60 = arith.constant 0 : index
    %c0_61 = arith.constant 0 : index
    %66 = vector.load %arg8[%c1_59, %c0_60, %c0_61] : memref<8x16x96xbf16, #tpu.memory_space<vmem>>, vector<4x16x96xbf16>
    %67 = vector.shape_cast %66 : vector<4x16x96xbf16> to vector<64x96xbf16>
    %c1_62 = arith.constant 1 : index
    %c0_63 = arith.constant 0 : index
    %c0_64 = arith.constant 0 : index
    %68 = vector.load %arg5[%c1_62, %c0_63, %c0_64] : memref<3x96x32xbf16, #tpu.memory_space<vmem>>, vector<1x96x32xbf16>
    %69 = vector.shape_cast %68 : vector<1x96x32xbf16> to vector<96x32xbf16>
    %cst_65 = arith.constant dense<0.000000e+00> : vector<64x32xf32>
    %70 = tpu.matmul %67, %69, %cst_65 {dimension_numbers = #tpu.dot_dimension_numbers<[1], [0], [0], [1], [0, 0, 1, 1], [], []>} : vector<64x96xbf16>, vector<96x32xbf16>, vector<64x32xf32> -> vector<64x32xf32>
    %71 = arith.addf %65, %70 : vector<64x32xf32>
    %c2_66 = arith.constant 2 : index
    %c0_67 = arith.constant 0 : index
    %c0_68 = arith.constant 0 : index
    %72 = vector.load %arg8[%c2_66, %c0_67, %c0_68] : memref<8x16x96xbf16, #tpu.memory_space<vmem>>, vector<4x16x96xbf16>
    %73 = vector.shape_cast %72 : vector<4x16x96xbf16> to vector<64x96xbf16>
    %c2_69 = arith.constant 2 : index
    %c0_70 = arith.constant 0 : index
    %c0_71 = arith.constant 0 : index
    %74 = vector.load %arg5[%c2_69, %c0_70, %c0_71] : memref<3x96x32xbf16, #tpu.memory_space<vmem>>, vector<1x96x32xbf16>
    %75 = vector.shape_cast %74 : vector<1x96x32xbf16> to vector<96x32xbf16>
    %cst_72 = arith.constant dense<0.000000e+00> : vector<64x32xf32>
    %76 = tpu.matmul %73, %75, %cst_72 {dimension_numbers = #tpu.dot_dimension_numbers<[1], [0], [0], [1], [0, 0, 1, 1], [], []>} : vector<64x96xbf16>, vector<96x32xbf16>, vector<64x32xf32> -> vector<64x32xf32>
    %77 = arith.addf %71, %76 : vector<64x32xf32>
    %78 = vector.broadcast %2 : vector<1x32xf32> to vector<64x32xf32>
    %79 = arith.addf %77, %78 : vector<64x32xf32>
    %80 = vector.shape_cast %79 : vector<64x32xf32> to vector<4x16x32xf32>
    %cst_73 = arith.constant 1.000000e-01 : f32
    %81 = vector.broadcast %cst_73 : f32 to vector<4x16x32xf32>
    %82 = arith.mulf %80, %81 : vector<4x16x32xf32>
    %83 = arith.addf %82, %1 : vector<4x16x32xf32>
    %c0_74 = arith.constant 0 : index
    %c0_75 = arith.constant 0 : index
    %c0_76 = arith.constant 0 : index
    %c0_77 = arith.constant 0 : index
    %84 = vector.load %arg7[%c0_74, %c0_75, %c0_76, %c0_77] : memref<1x4x16x32xf32, #tpu.memory_space<vmem>>, vector<1x4x16x32xf32>
    %85 = vector.shape_cast %84 : vector<1x4x16x32xf32> to vector<4x16x32xf32>
    %86 = vector.shape_cast %83 : vector<4x16x32xf32> to vector<1x4x16x32xf32>
    tpu.vector_store %arg7[%c0_74, %c0_75, %c0_76, %c0_77], %86 {strides = array<i32>} : memref<1x4x16x32xf32, #tpu.memory_space<vmem>>, vector<1x4x16x32xf32>,
    return
  }
  func.func @transform_0(%arg0: i32, %arg1: i32) -> (i32, i32, i32, i32) {
    %c0_i32 = arith.constant 0 : i32
    %c0_i32_0 = arith.constant 0 : i32
    %c0_i32_1 = arith.constant 0 : i32
    return %arg0, %arg1, %c0_i32, %c0_i32_0 : i32, i32, i32, i32
  }
  func.func @transform_1(%arg0: i32, %arg1: i32) -> (i32, i32, i32, i32) {
    %c2_i32 = arith.constant 2 : i32
    %0 = arith.muli %arg1, %c2_i32 : i32
    %c1_i32 = arith.constant 1 : i32
    %1 = arith.subi %0, %c1_i32 : i32
    %c0_i32 = arith.constant 0 : i32
    %2 = arith.maxsi %1, %c0_i32 : i32
    %c0_i32_0 = arith.constant 0 : i32
    %c0_i32_1 = arith.constant 0 : i32
    %c0_i32_2 = arith.constant 0 : i32
    return %arg0, %2, %c0_i32_0, %c0_i32_1 : i32, i32, i32, i32
  }
  func.func @transform_2(%arg0: i32, %arg1: i32) -> (i32, i32, i32, i32) {
    %c1_i32 = arith.constant 1 : i32
    %0 = arith.addi %arg1, %c1_i32 : i32
    %c2_i32 = arith.constant 2 : i32
    %1 = arith.muli %0, %c2_i32 : i32
    %c7_i32 = arith.constant 7 : i32
    %2 = arith.minsi %1, %c7_i32 : i32
    %c0_i32 = arith.constant 0 : i32
    %c0_i32_0 = arith.constant 0 : i32
    %c0_i32_1 = arith.constant 0 : i32
    return %arg0, %2, %c0_i32, %c0_i32_0 : i32, i32, i32, i32
  }
  func.func @transform_3(%arg0: i32, %arg1: i32) -> (i32, i32, i32) {
    %c0_i32 = arith.constant 0 : i32
    %c0_i32_0 = arith.constant 0 : i32
    %c0_i32_1 = arith.constant 0 : i32
    %c0_i32_2 = arith.constant 0 : i32
    return %c0_i32, %c0_i32_0, %c0_i32_1 : i32, i32, i32
  }
  func.func @transform_4(%arg0: i32, %arg1: i32) -> (i32, i32) {
    %c0_i32 = arith.constant 0 : i32
    %c0_i32_0 = arith.constant 0 : i32
    %c0_i32_1 = arith.constant 0 : i32
    return %c0_i32, %c0_i32_0 : i32, i32
  }
  func.func @transform_5(%arg0: i32, %arg1: i32) -> (i32, i32, i32, i32) {
    %c0_i32 = arith.constant 0 : i32
    %c0_i32_0 = arith.constant 0 : i32
    %c0_i32_1 = arith.constant 0 : i32
    return %arg0, %arg1, %c0_i32, %c0_i32_0 : i32, i32, i32, i32
  }
}

</mosaic_0001>

<llo_original>
// kernel: tpu_custom_call.1
$region0: #{tpu_custom_call.1}
  #allocation0 [shape = 'u32[]', space=smem, size = 0x4, offset = 0x4, fixed_abs, tag = 'smem constant byte address 0x4 - core index']
  #allocation1 [shape = 'u32[144,128]{1,0:T(1,128)}', space=vmem, size = 0x12000, scoped, tag = 'internal scratch']
  #allocation2 [shape = 'bf16[8,16,96]{2,1,0:T(8,128)(2,1)}', space=vmem, size = 0x8000, scoped, tag = 'scratch operand']
  %s0 = inlined_call_operand.hbm [shape: f32[2,16,16,32], index: 0, kind: input, shape index: {}]
  %s1 = inlined_call_operand.hbm [shape: f32[2,16,16,32], index: 1, kind: input, shape index: {}]
  %s2 = inlined_call_operand.hbm [shape: f32[2,16,16,32], index: 2, kind: input, shape index: {}]
  %s3 = inlined_call_operand.vmem [shape: bf16[3,96,32], index: 3, kind: input, shape index: {}]
  %s4 = inlined_call_operand.vmem [shape: f32[1,32], index: 4, kind: input, shape index: {}]
  %s5 = inlined_call_operand.hbm [shape: f32[2,16,16,32], index: 5, kind: output, shape index: {}]
  %s6 = sld [smem:[#allocation0]]
  $region89: #{tpu_custom_call.1} parent=0
    _
  %s8 = ssub.s32 1, %s6
  %s9 = scalar_select 0, %s8, %s6
  $region1: #{tpu_custom_call.1} parent=0
    #allocation3 [shape = 'u8[65536]{0}', space=vmem, size = 0x10000, scoped, tag = 'input window, operand 0']
    #allocation4 [shape = 's32[2]{0}', space=sflag, size = 0x8, scoped, tag = 'scoped memory for tpu_custom_call.1']
    #allocation5 [shape = 's32[2]{0}', space=sflag, size = 0x8, scoped, tag = 'scoped memory for tpu_custom_call.1']
    #allocation6 [shape = 'u8[32768]{0}', space=vmem, size = 0x8000, scoped, tag = 'input window, operand 1']
    #allocation7 [shape = 's32[2]{0}', space=sflag, size = 0x8, scoped, tag = 'scoped memory for tpu_custom_call.1']
    #allocation8 [shape = 'u8[32768]{0}', space=vmem, size = 0x8000, scoped, tag = 'input window, operand 2']
    #allocation9 [shape = 'u8[65536]{0}', space=vmem, size = 0x10000, scoped, tag = 'output window, operand 0']
    %10 = vsyncpa [#allocation4], 0
    %s11 = scalar_lea.sflag [#allocation4], 1
    %12 = vsyncpa %s11, 0
    %13 = vsyncpa [#allocation7], 0
    %s14 = scalar_lea.sflag [#allocation7], 1
    %15 = vsyncpa %s14, 0
    %16 = vsyncpa [#allocation5], 0
    %s17 = scalar_lea.sflag [#allocation5], 1
    %18 = vsyncpa %s17, 0
    loop: start=0, step=1, limit=10
    $region2: #{tpu_custom_call.1} parent=1 // loop_pre_header
      _
    $region3: #{tpu_custom_call.1} parent=1 // loop_header
      %s20 = sphi 0, %s24
      %p21 = scmp.ge.s32.totalorder %s20, 10
      %s27 = sphi 0, %s39
      %s28 = sphi 0, %s35
      %s29 = sphi 0, %s27
      %s30 = sphi 0, %s28
      %s31 = sphi 0, %s29
      %s32 = sphi 0, %s30
      %s44 = sphi 0, %s46
      %s47 = sphi 0, %s44
      %s48 = sphi 0, %s47
      %s64 = sphi 0, %s48
      %s80 = sphi 0, %s82
      %s83 = sphi 0, %s80
      %s84 = sphi 0, %s83
      %s100 = sphi 0, %s84
      %s116 = sphi 0, %s118
      %s119 = sphi 0, %s116
      %s120 = sphi 0, %s119
      %s136 = sphi 0, %s120
      %s140 = sphi 0, %s140
      %s142 = sphi 0, %s140
      %s143 = sphi 0, %s142
      %s157 = sphi 0, %s143
      %s161 = sphi 0, %s161
      %s163 = sphi 0, %s161
      %s164 = sphi 0, %s163
      %s178 = sphi 0, %s164
      %s186 = sphi 0, %s188
      %s189 = sphi 0, %s186
      %s190 = sphi 0, %s189
      %s206 = sphi 0, %s190
    $region4: #{tpu_custom_call.1} parent=1 // loop_header_branch
      %23 = sbr.rel (%p21) target = $region8
    $region5: #{tpu_custom_call.1} parent=1 // loop_body
      %s25 = ssub.s32 %s20, 1
      %s26 = ssub.s32 %s20, 2
      %s33 = sadd.s32 1, %s28
      %p34 = scmp.ge.s32.totalorder %s33, 4
      %s35 = scalar_select %p34, 0, %s33
      %s36 = sadd.s32 1, %s27
      %s37 = scalar_select %p34, %s36, %s27
      %p38 = scmp.ge.s32.totalorder %s37, 2
      %s39 = scalar_select %p38, 0, %s37
      %s40 = ssub.s32 %s27, %s39
      %s41 = ssub.s32 %s28, %s35
      %s42 = sor.u32 %s40, %s41
      %p43 = scmp.eq.s32.totalorder %s42, 0
      %s45 = sadd.s32 %s44, 1
      %s46 = scalar_select %p43, %s44, %s45
      %p49 = pneg %p43
      %p50 = scmp.eq.s32.totalorder %s20, 7
      %p51 = por %p49, %p50
      %p52 = scmp.ne.s32.totalorder %s44, %s47
      %p53 = scmp.eq.s32.totalorder %s20, 0
      %p54 = por %p52, %p53
      %p55 = scmp.ne.s32.totalorder %s44, %s47
      %p56 = scmp.eq.s32.totalorder %s25, 7
      %p57 = por %p55, %p56
      %p58 = scmp.ne.s32.totalorder %s47, %s48
      %p59 = scmp.eq.s32.totalorder %s25, 0
      %p60 = por %p58, %p59
      %p61 = scmp.ne.s32.totalorder %s47, %s48
      %p62 = scmp.eq.s32.totalorder %s26, 7
      %p63 = por %p61, %p62
      %p65 = scmp.ne.s32.totalorder %s48, %s64
      %p66 = scmp.eq.s32.totalorder %s26, 0
      %p67 = por %p65, %p66
      %s68 = smul.u32 %s28, 2
      %s69 = ssub.s32 %s68, 1
      %p70 = scmp.gt.s32.totalorder %s69, 0
      %s71 = scalar_select %p70, %s69, 0
      %s72 = smul.u32 %s35, 2
      %s73 = ssub.s32 %s72, 1
      %p74 = scmp.gt.s32.totalorder %s73, 0
      %s75 = scalar_select %p74, %s73, 0
      %s76 = ssub.s32 %s27, %s39
      %s77 = ssub.s32 %s71, %s75
      %s78 = sor.u32 %s76, %s77
      %p79 = scmp.eq.s32.totalorder %s78, 0
      %s81 = sadd.s32 %s80, 1
      %s82 = scalar_select %p79, %s80, %s81
      %p85 = pneg %p79
      %p86 = scmp.eq.s32.totalorder %s20, 7
      %p87 = por %p85, %p86
      %p88 = scmp.ne.s32.totalorder %s80, %s83
      %p89 = scmp.eq.s32.totalorder %s20, 0
      %p90 = por %p88, %p89
      %p91 = scmp.ne.s32.totalorder %s80, %s83
      %p92 = scmp.eq.s32.totalorder %s25, 7
      %p93 = por %p91, %p92
      %p94 = scmp.ne.s32.totalorder %s83, %s84
      %p95 = scmp.eq.s32.totalorder %s25, 0
      %p96 = por %p94, %p95
      %p97 = scmp.ne.s32.totalorder %s83, %s84
      %p98 = scmp.eq.s32.totalorder %s26, 7
      %p99 = por %p97, %p98
      %p101 = scmp.ne.s32.totalorder %s84, %s100
      %p102 = scmp.eq.s32.totalorder %s26, 0
      %p103 = por %p101, %p102
      %s104 = sadd.s32 %s28, 1
      %s105 = smul.u32 %s104, 2
      %p106 = scmp.lt.s32.totalorder %s105, 7
      %s107 = scalar_select %p106, %s105, 7
      %s108 = sadd.s32 %s35, 1
      %s109 = smul.u32 %s108, 2
      %p110 = scmp.lt.s32.totalorder %s109, 7
      %s111 = scalar_select %p110, %s109, 7
      %s112 = ssub.s32 %s27, %s39
      %s113 = ssub.s32 %s107, %s111
      %s114 = sor.u32 %s112, %s113
      %p115 = scmp.eq.s32.totalorder %s114, 0
      %s117 = sadd.s32 %s116, 1
      %s118 = scalar_select %p115, %s116, %s117
      %p121 = pneg %p115
      %p122 = scmp.eq.s32.totalorder %s20, 7
      %p123 = por %p121, %p122
      %p124 = scmp.ne.s32.totalorder %s116, %s119
      %p125 = scmp.eq.s32.totalorder %s20, 0
      %p126 = por %p124, %p125
      %p127 = scmp.ne.s32.totalorder %s116, %s119
      %p128 = scmp.eq.s32.totalorder %s25, 7
      %p129 = por %p127, %p128
      %p130 = scmp.ne.s32.totalorder %s119, %s120
      %p131 = scmp.eq.s32.totalorder %s25, 0
      %p132 = por %p130, %p131
      %p133 = scmp.ne.s32.totalorder %s119, %s120
      %p134 = scmp.eq.s32.totalorder %s26, 7
      %p135 = por %p133, %p134
      %p137 = scmp.ne.s32.totalorder %s120, %s136
      %p138 = scmp.eq.s32.totalorder %s26, 0
      %p139 = por %p137, %p138
      %s141 = sadd.s32 %s140, 1
      %p144 = scmp.eq.s32.totalorder %s20, 7
      %p145 = scmp.ne.s32.totalorder %s140, %s142
      %p146 = scmp.eq.s32.totalorder %s20, 0
      %p147 = por %p145, %p146
      %p148 = scmp.ne.s32.totalorder %s140, %s142
      %p149 = scmp.eq.s32.totalorder %s25, 7
      %p150 = por %p148, %p149
      %p151 = scmp.ne.s32.totalorder %s142, %s143
      %p152 = scmp.eq.s32.totalorder %s25, 0
      %p153 = por %p151, %p152
      %p154 = scmp.ne.s32.totalorder %s142, %s143
      %p155 = scmp.eq.s32.totalorder %s26, 7
      %p156 = por %p154, %p155
      %p158 = scmp.ne.s32.totalorder %s143, %s157
      %p159 = scmp.eq.s32.totalorder %s26, 0
      %p160 = por %p158, %p159
      %s162 = sadd.s32 %s161, 1
      %p165 = scmp.eq.s32.totalorder %s20, 7
      %p166 = scmp.ne.s32.totalorder %s161, %s163
      %p167 = scmp.eq.s32.totalorder %s20, 0
      %p168 = por %p166, %p167
      %p169 = scmp.ne.s32.totalorder %s161, %s163
      %p170 = scmp.eq.s32.totalorder %s25, 7
      %p171 = por %p169, %p170
      %p172 = scmp.ne.s32.totalorder %s163, %s164
      %p173 = scmp.eq.s32.totalorder %s25, 0
      %p174 = por %p172, %p173
      %p175 = scmp.ne.s32.totalorder %s163, %s164
      %p176 = scmp.eq.s32.totalorder %s26, 7
      %p177 = por %p175, %p176
      %p179 = scmp.ne.s32.totalorder %s164, %s178
      %p180 = scmp.eq.s32.totalorder %s26, 0
      %p181 = por %p179, %p180
      %s182 = ssub.s32 %s27, %s39
      %s183 = ssub.s32 %s28, %s35
      %s184 = sor.u32 %s182, %s183
      %p185 = scmp.eq.s32.totalorder %s184, 0
      %s187 = sadd.s32 %s186, 1
      %s188 = scalar_select %p185, %s186, %s187
      %p191 = pneg %p185
      %p192 = scmp.eq.s32.totalorder %s20, 7
      %p193 = por %p191, %p192
      %p194 = scmp.ne.s32.totalorder %s186, %s189
      %p195 = scmp.eq.s32.totalorder %s20, 0
      %p196 = por %p194, %p195
      %p197 = scmp.ne.s32.totalorder %s186, %s189
      %p198 = scmp.eq.s32.totalorder %s25, 7
      %p199 = por %p197, %p198
      %p200 = scmp.ne.s32.totalorder %s189, %s190
      %p201 = scmp.eq.s32.totalorder %s25, 0
      %p202 = por %p200, %p201
      %p203 = scmp.ne.s32.totalorder %s189, %s190
      %p204 = scmp.eq.s32.totalorder %s26, 7
      %p205 = por %p203, %p204
      %p207 = scmp.ne.s32.totalorder %s190, %s206
      %p208 = scmp.eq.s32.totalorder %s26, 0
      %p209 = por %p207, %p208
      %p210 = scmp.le.s32.totalorder 1, %s20
      %p211 = scmp.lt.s32.totalorder %s20, 9
      %p212 = pnand %p210, %p211
      %p213 = pneg %p212
      // Predicated region
      $region9: #{tpu_custom_call.1} parent=5 // pred_check
        _
      $region10: #{tpu_custom_call.1} parent=5 // pred_check_branch
        %215 = sbr.rel (%p212) target = $region12
      $region11: #{tpu_custom_call.1} parent=5 // pred_region
        %s216 = ssub.s32 %s20, 1
        // Predicated region
        $region13: #{tpu_custom_call.1} parent=11 // pred_check
          %p217 = pneg %p153
        $region14: #{tpu_custom_call.1} parent=11 // pred_check_branch
          %219 = sbr.rel (%p217) target = $region16
        $region15: #{tpu_custom_call.1} parent=11 // pred_region
          _
        $region16: #{tpu_custom_call.1} parent=11 // pred_fallthru
          _
        // Predicated region
        $region17: #{tpu_custom_call.1} parent=11 // pred_check
          %p220 = pneg %p174
        $region18: #{tpu_custom_call.1} parent=11 // pred_check_branch
          %222 = sbr.rel (%p220) target = $region20
        $region19: #{tpu_custom_call.1} parent=11 // pred_region
          _
        $region20: #{tpu_custom_call.1} parent=11 // pred_fallthru
          _
      $region12: #{tpu_custom_call.1} parent=5 // pred_fallthru
        _
      %p223 = scmp.lt.s32.totalorder %s20, 8
      // Predicated region
      $region21: #{tpu_custom_call.1} parent=5 // pred_check
        %p224 = pneg %p223
      $region22: #{tpu_custom_call.1} parent=5 // pred_check_branch
        %226 = sbr.rel (%p224) target = $region24
      $region23: #{tpu_custom_call.1} parent=5 // pred_region
        // Predicated region
        $region25: #{tpu_custom_call.1} parent=23 // pred_check
          %p227 = pneg %p54
        $region26: #{tpu_custom_call.1} parent=23 // pred_check_branch
          %229 = sbr.rel (%p227) target = $region28
        $region27: #{tpu_custom_call.1} parent=23 // pred_region
          %s230 = sand.u32 %s44, 1
          %s231 = scalar_lea.sflag [#allocation4], %s230
          %s232 = sand.u32 %s44, 1
          %s233 = smul.addr %s232, 64
          %s234 = scalar_lea.vmem [#allocation3], %s233
          %s235 = smul.u32 4, %s28
          %s237 = ssub.s32 1024, 1024
          %238 = vsyncadd %s231, %s237
          %s239 = smul.addr %s235, 2
          %s240 = smul.addr %s27, 32
          %s241 = sadd.s32 %s239, %s240
          %s242 = smul.addr %s241, 128
          %s243 = scalar_lea.hbm %s0, %s242
          %s244 = sshll.u32 %s234, 4
          %s245 = int_to_ptr.vmem [resolvable:$true] %s244
          %250 = dma.hbm_to_vmem [thread:$0]  %s243, 1024, %s245, %s231, 128, 128, 8
        $region28: #{tpu_custom_call.1} parent=23 // pred_fallthru
          _
        // Predicated region
        $region29: #{tpu_custom_call.1} parent=23 // pred_check
          %p251 = pneg %p90
        $region30: #{tpu_custom_call.1} parent=23 // pred_check_branch
          %253 = sbr.rel (%p251) target = $region32
        $region31: #{tpu_custom_call.1} parent=23 // pred_region
          %s254 = sand.u32 %s20, 1
          %s255 = scalar_lea.sflag [#allocation7], %s254
          %s256 = sand.u32 %s80, 1
          %s257 = smul.addr %s256, 32
          %s258 = scalar_lea.vmem [#allocation6], %s257
          %s259 = smul.u32 %s28, 2
          %s260 = ssub.s32 %s259, 1
          %p261 = scmp.gt.s32.totalorder %s260, 0
          %s262 = scalar_select %p261, %s260, 0
          %s263 = smul.u32 2, %s262
          %s265 = ssub.s32 512, 512
          %266 = vsyncadd %s255, %s265
          %s267 = smul.addr %s263, 2
          %s268 = smul.addr %s27, 32
          %s269 = sadd.s32 %s267, %s268
          %s270 = smul.addr %s269, 128
          %s271 = scalar_lea.hbm %s1, %s270
          %s272 = sshll.u32 %s258, 4
          %s273 = int_to_ptr.vmem [resolvable:$true] %s272
          %278 = dma.hbm_to_vmem [thread:$0]  %s271, 512, %s273, %s255, 128, 128, 8
        $region32: #{tpu_custom_call.1} parent=23 // pred_fallthru
          _
        // Predicated region
        $region33: #{tpu_custom_call.1} parent=23 // pred_check
          %p279 = pneg %p126
        $region34: #{tpu_custom_call.1} parent=23 // pred_check_branch
          %281 = sbr.rel (%p279) target = $region36
        $region35: #{tpu_custom_call.1} parent=23 // pred_region
          %s282 = sand.u32 %s20, 1
          %s283 = scalar_lea.sflag [#allocation7], %s282
          %s284 = sand.u32 %s116, 1
          %s285 = smul.addr %s284, 32
          %s286 = scalar_lea.vmem [#allocation8], %s285
          %s287 = sadd.s32 %s28, 1
          %s288 = smul.u32 %s287, 2
          %p289 = scmp.lt.s32.totalorder %s288, 7
          %s290 = scalar_select %p289, %s288, 7
          %s291 = smul.u32 2, %s290
          %s293 = ssub.s32 512, 512
          %294 = vsyncadd %s283, %s293
          %s295 = smul.addr %s291, 2
          %s296 = smul.addr %s27, 32
          %s297 = sadd.s32 %s295, %s296
          %s298 = smul.addr %s297, 128
          %s299 = scalar_lea.hbm %s2, %s298
          %s300 = sshll.u32 %s286, 4
          %s301 = int_to_ptr.vmem [resolvable:$true] %s300
          %306 = dma.hbm_to_vmem [thread:$0]  %s299, 512, %s301, %s283, 128, 128, 8
        $region36: #{tpu_custom_call.1} parent=23 // pred_fallthru
          _
      $region24: #{tpu_custom_call.1} parent=5 // pred_fallthru
        _
      %p307 = scmp.le.s32.totalorder 1, %s20
      %p308 = scmp.lt.s32.totalorder %s20, 9
      %p309 = pnand %p307, %p308
      %p310 = pneg %p309
      // Predicated region
      $region37: #{tpu_custom_call.1} parent=5 // pred_check
        _
      $region38: #{tpu_custom_call.1} parent=5 // pred_check_branch
        %312 = sbr.rel (%p309) target = $region40
      $region39: #{tpu_custom_call.1} parent=5 // pred_region
        %s313 = ssub.s32 %s20, 1
        %s314 = sand.u32 %s47, 1
        %s315 = scalar_lea.sflag [#allocation4], %s314
        %s316 = sand.u32 %s47, 1
        %s317 = smul.addr %s316, 64
        %s318 = scalar_lea.vmem [#allocation3], %s317
        // Predicated region
        $region41: #{tpu_custom_call.1} parent=39 // pred_check
          %p319 = pneg %p60
        $region42: #{tpu_custom_call.1} parent=39 // pred_check_branch
          %321 = sbr.rel (%p319) target = $region44
        $region43: #{tpu_custom_call.1} parent=39 // pred_region
          %322 = dma.done %s315, 1024
        $region44: #{tpu_custom_call.1} parent=39 // pred_fallthru
          _
        %s323 = sand.u32 %s25, 1
        %s324 = scalar_lea.sflag [#allocation7], %s323
        %s325 = sand.u32 %s83, 1
        %s326 = smul.addr %s325, 32
        %s327 = scalar_lea.vmem [#allocation6], %s326
        // Predicated region
        $region45: #{tpu_custom_call.1} parent=39 // pred_check
          %p328 = pneg %p96
        $region46: #{tpu_custom_call.1} parent=39 // pred_check_branch
          %330 = sbr.rel (%p328) target = $region48
        $region47: #{tpu_custom_call.1} parent=39 // pred_region
          %331 = dma.done %s324, 512
        $region48: #{tpu_custom_call.1} parent=39 // pred_fallthru
          _
        %s332 = sand.u32 %s25, 1
        %s333 = scalar_lea.sflag [#allocation7], %s332
        %s334 = sand.u32 %s119, 1
        %s335 = smul.addr %s334, 32
        %s336 = scalar_lea.vmem [#allocation8], %s335
        // Predicated region
        $region49: #{tpu_custom_call.1} parent=39 // pred_check
          %p337 = pneg %p132
        $region50: #{tpu_custom_call.1} parent=39 // pred_check_branch
          %339 = sbr.rel (%p337) target = $region52
        $region51: #{tpu_custom_call.1} parent=39 // pred_region
          %340 = dma.done %s333, 512
        $region52: #{tpu_custom_call.1} parent=39 // pred_fallthru
          _
        %s341 = sand.u32 %s47, 1
        %s342 = scalar_lea.sflag [#allocation4], %s341
        %s343 = sand.u32 %s47, 1
        %s344 = smul.addr %s343, 64
        %s345 = scalar_lea.vmem [#allocation3], %s344
        %p346 = pneg %p60
        %p347 = pneg %p57
        %s348 = sand.u32 %s25, 1
        %s349 = scalar_lea.sflag [#allocation7], %s348
        %s350 = sand.u32 %s83, 1
        %s351 = smul.addr %s350, 32
        %s352 = scalar_lea.vmem [#allocation6], %s351
        %p353 = pneg %p96
        %p354 = pneg %p93
        %s355 = sand.u32 %s25, 1
        %s356 = scalar_lea.sflag [#allocation7], %s355
        %s357 = sand.u32 %s119, 1
        %s358 = smul.addr %s357, 32
        %s359 = scalar_lea.vmem [#allocation8], %s358
        %p360 = pneg %p132
        %p361 = pneg %p129
        %p362 = pneg %p153
        %p363 = pneg %p150
        %p364 = pneg %p174
        %p365 = pneg %p171
        %p366 = pneg %p202
        %p367 = pneg %p199
        %s368 = sand.u32 %s189, 1
        %s369 = scalar_lea.sflag [#allocation5], %s368
        %s370 = sand.u32 %s189, 1
        %s371 = smul.addr %s370, 64
        %s372 = scalar_lea.vmem [#allocation9], %s371
        %s373 = smul.u32 4, %s30
        %s374 = smul.u32 %s30, 2
        %s375 = ssub.s32 %s374, 1
        %p376 = scmp.gt.s32.totalorder %s375, 0
        %s377 = scalar_select %p376, %s375, 0
        %s378 = smul.u32 2, %s377
        %s379 = sadd.s32 %s30, 1
        %s380 = smul.u32 %s379, 2
        %p381 = scmp.lt.s32.totalorder %s380, 7
        %s382 = scalar_select %p381, %s380, 7
        %s383 = smul.u32 2, %s382
        %s384 = smul.u32 4, %s30
        %v386 = vld [vmem:[%s318] sm:$0xff]
        %v387 = vld [vmem:[%s318 + $0x8] sm:$0xff]
        %v388 = vld [vmem:[%s318 + $0x10] sm:$0xff]
        %v389 = vld [vmem:[%s318 + $0x18] sm:$0xff]
        %v390 = vld [vmem:[%s318 + $0x20] sm:$0xff]
        %v391 = vld [vmem:[%s318 + $0x28] sm:$0xff]
        %v392 = vld [vmem:[%s318 + $0x30] sm:$0xff]
        %v393 = vld [vmem:[%s318 + $0x38] sm:$0xff]
        %v394 = vld [vmem:[%s4] sm:$0x1]
        %p395 = scmp.eq.s32.totalorder %s30, 0
        // Predicated region
        $region53: #{tpu_custom_call.1} parent=39 // pred_check
          %p396 = pneg %p395
        $region54: #{tpu_custom_call.1} parent=39 // pred_check_branch
          %398 = sbr.rel (%p396) target = $region56
        $region55: #{tpu_custom_call.1} parent=39 // pred_region
          %vm399 = vcmask 781312
          %400 = vst.msk [vmem:[#allocation2] sm:$0xf] %vm399, 0
          %401 = vst.msk [vmem:[#allocation2 + $0x4] sm:$0xf] %vm399, 0
          %402 = vst.msk [vmem:[#allocation2 + $0x8] sm:$0xf] %vm399, 0
          %403 = vst.msk [vmem:[#allocation2 + $0xc] sm:$0xf] %vm399, 0
        $region56: #{tpu_custom_call.1} parent=39 // pred_fallthru
          _
        %p404 = scmp.gt.s32.totalorder %s30, 0
        // Predicated region
        $region57: #{tpu_custom_call.1} parent=39 // pred_check
          %p405 = pneg %p404
        $region58: #{tpu_custom_call.1} parent=39 // pred_check_branch
          %407 = sbr.rel (%p405) target = $region60
        $region59: #{tpu_custom_call.1} parent=39 // pred_region
          %v408 = vld [vmem:[%s327] sm:$0xff]
          %v409 = vld [vmem:[%s327 + $0x8] sm:$0xff]
          %v410 = vld [vmem:[%s327 + $0x10] sm:$0xff]
          %v411 = vld [vmem:[%s327 + $0x18] sm:$0xff]
          %v412 = vpack.c.bf16 %v409, %v408
          %v413 = vpack.c.bf16 %v411, %v410
          %v416 = vunpack.c.l.b16 %v412
          %v417 = vunpack.c.h.b16 %v412
          %v418 = vunpack.c.l.b16 %v413
          %v419 = vunpack.c.h.b16 %v413
          %v420 = vpack.c.b16 %v416, %v416
          %v421 = vpack.c.b16 %v417, %v417
          %v422 = vpack.c.b16 %v418, %v418
          %v423 = vpack.c.b16 %v419, %v419
          %424 = vrot.lane.b32.xlu0 %v420, 32
          %v425 = vpop.permute.xlu0 %424
          %426 = vrot.lane.b32.xlu0 %v421, 32
          %v427 = vpop.permute.xlu0 %426
          %428 = vrot.lane.b32.xlu0 %v422, 32
          %v429 = vpop.permute.xlu0 %428
          %430 = vrot.lane.b32.xlu0 %v423, 32
          %v431 = vpop.permute.xlu0 %430
          %vm436 = vcmask 519424
          %437 = vst.msk [vmem:[#allocation2] sm:$0xf] %vm436, %v425
          %438 = vst.msk [vmem:[#allocation2 + $0x4] sm:$0xf] %vm436, %v427
          %439 = vst.msk [vmem:[#allocation2 + $0x8] sm:$0xf] %vm436, %v429
          %440 = vst.msk [vmem:[#allocation2 + $0xc] sm:$0xf] %vm436, %v431
          %v442 = vshrl.u32 %v412, 16
          %v444 = vrot.slane %v442, 7
          %v445 = vshll.u32 %v412, 16
          %v447 = vor.u32 %v444, %v445
          %v449 = vshrl.u32 %v413, 16
          %v451 = vrot.slane %v449, 7
          %v452 = vshll.u32 %v413, 16
          %v454 = vor.u32 %v451, %v452
          %vm457 = vcmask 1040384
          %vm458 = vsmask.f32 256
          %vm459 = vmand %vm457, %vm458
          %v460 = vsel %vm459, 0, %v447
          %v461 = vsel %vm459, 0, %v454
          %v464 = vunpack.c.l.b16 %v460
          %v465 = vunpack.c.h.b16 %v460
          %v466 = vunpack.c.l.b16 %v461
          %v467 = vunpack.c.h.b16 %v461
          %v468 = vpack.c.b16 %v464, %v464
          %v469 = vpack.c.b16 %v465, %v465
          %v470 = vpack.c.b16 %v466, %v466
          %v471 = vpack.c.b16 %v467, %v467
          %vm476 = vcmask 257024
          %477 = vst.msk [vmem:[#allocation2] sm:$0xf] %vm476, %v468
          %478 = vst.msk [vmem:[#allocation2 + $0x4] sm:$0xf] %vm476, %v469
          %479 = vst.msk [vmem:[#allocation2 + $0x8] sm:$0xf] %vm476, %v470
          %480 = vst.msk [vmem:[#allocation2 + $0xc] sm:$0xf] %vm476, %v471
          %v481 = vrot.slane %v445, 1
          %v482 = vor.u32 %v442, %v481
          %v483 = vrot.slane %v452, 1
          %v484 = vor.u32 %v449, %v483
          %vm487 = vcmask 1047552
          %vm488 = vsmask.f32 7424
          %vm489 = vmand %vm487, %vm488
          %v490 = vsel %vm489, %v482, 0
          %v491 = vsel %vm489, %v484, 0
          %v494 = vunpack.c.l.b16 %v490
          %v495 = vunpack.c.h.b16 %v490
          %v496 = vunpack.c.l.b16 %v491
          %v497 = vunpack.c.h.b16 %v491
          %v498 = vpack.c.b16 %v494, %v494
          %v499 = vpack.c.b16 %v495, %v495
          %v500 = vpack.c.b16 %v496, %v496
          %v501 = vpack.c.b16 %v497, %v497
          %502 = vrot.lane.b32.xlu0 %v498, 64
          %v503 = vpop.permute.xlu0 %502
          %504 = vrot.lane.b32.xlu0 %v499, 64
          %v505 = vpop.permute.xlu0 %504
          %506 = vrot.lane.b32.xlu0 %v500, 64
          %v507 = vpop.permute.xlu0 %506
          %508 = vrot.lane.b32.xlu0 %v501, 64
          %v509 = vpop.permute.xlu0 %508
          %vm514 = vcmask 781824
          %515 = vst.msk [vmem:[#allocation2] sm:$0xf] %vm514, %v503
          %516 = vst.msk [vmem:[#allocation2 + $0x4] sm:$0xf] %vm514, %v505
          %517 = vst.msk [vmem:[#allocation2 + $0x8] sm:$0xf] %vm514, %v507
          %518 = vst.msk [vmem:[#allocation2 + $0xc] sm:$0xf] %vm514, %v509
        $region60: #{tpu_custom_call.1} parent=39 // pred_fallthru
          _
        %v519 = vpack.c.bf16 %v387, %v386
        %v520 = vpack.c.bf16 %v389, %v388
        %v521 = vpack.c.bf16 %v391, %v390
        %v522 = vpack.c.bf16 %v393, %v392
        %v527 = vunpack.c.l.b16 %v519
        %v528 = vunpack.c.h.b16 %v519
        %v529 = vunpack.c.l.b16 %v520
        %v530 = vunpack.c.h.b16 %v520
        %v531 = vunpack.c.l.b16 %v521
        %v532 = vunpack.c.h.b16 %v521
        %v533 = vunpack.c.l.b16 %v522
        %v534 = vunpack.c.h.b16 %v522
        %v535 = vpack.c.b16 %v527, %v527
        %v536 = vpack.c.b16 %v528, %v528
        %v537 = vpack.c.b16 %v529, %v529
        %v538 = vpack.c.b16 %v530, %v530
        %v539 = vpack.c.b16 %v531, %v531
        %v540 = vpack.c.b16 %v532, %v532
        %v541 = vpack.c.b16 %v533, %v533
        %v542 = vpack.c.b16 %v534, %v534
        %543 = vrot.lane.b32.xlu0 %v535, 32
        %v544 = vpop.permute.xlu0 %543
        %545 = vrot.lane.b32.xlu0 %v536, 32
        %v546 = vpop.permute.xlu0 %545
        %547 = vrot.lane.b32.xlu0 %v537, 32
        %v548 = vpop.permute.xlu0 %547
        %549 = vrot.lane.b32.xlu0 %v538, 32
        %v550 = vpop.permute.xlu0 %549
        %551 = vrot.lane.b32.xlu0 %v539, 32
        %v552 = vpop.permute.xlu0 %551
        %553 = vrot.lane.b32.xlu0 %v540, 32
        %v554 = vpop.permute.xlu0 %553
        %555 = vrot.lane.b32.xlu0 %v541, 32
        %v556 = vpop.permute.xlu0 %555
        %557 = vrot.lane.b32.xlu0 %v542, 32
        %v558 = vpop.permute.xlu0 %557
        %s567 = scalar_lea.vmem [#allocation2], 16
        %vm568 = vcmask 519424
        %569 = vst.msk [vmem:[%s567] sm:$0xf] %vm568, %v544
        %570 = vst.msk [vmem:[%s567 + $0x4] sm:$0xf] %vm568, %v546
        %571 = vst.msk [vmem:[%s567 + $0x8] sm:$0xf] %vm568, %v548
        %572 = vst.msk [vmem:[%s567 + $0xc] sm:$0xf] %vm568, %v550
        %573 = vst.msk [vmem:[%s567 + $0x10] sm:$0xf] %vm568, %v552
        %574 = vst.msk [vmem:[%s567 + $0x14] sm:$0xf] %vm568, %v554
        %575 = vst.msk [vmem:[%s567 + $0x18] sm:$0xf] %vm568, %v556
        %576 = vst.msk [vmem:[%s567 + $0x1c] sm:$0xf] %vm568, %v558
        %v578 = vshrl.u32 %v519, 16
        %v580 = vrot.slane %v578, 7
        %v581 = vshll.u32 %v519, 16
        %v583 = vor.u32 %v580, %v581
        %v585 = vshrl.u32 %v520, 16
        %v587 = vrot.slane %v585, 7
        %v588 = vshll.u32 %v520, 16
        %v590 = vor.u32 %v587, %v588
        %v592 = vshrl.u32 %v521, 16
        %v594 = vrot.slane %v592, 7
        %v595 = vshll.u32 %v521, 16
        %v597 = vor.u32 %v594, %v595
        %v599 = vshrl.u32 %v522, 16
        %v601 = vrot.slane %v599, 7
        %v602 = vshll.u32 %v522, 16
        %v604 = vor.u32 %v601, %v602
        %vm609 = vcmask 1040384
        %vm610 = vsmask.f32 256
        %vm611 = vmand %vm609, %vm610
        %v612 = vsel %vm611, 0, %v583
        %v613 = vsel %vm611, 0, %v590
        %v614 = vsel %vm611, 0, %v597
        %v615 = vsel %vm611, 0, %v604
        %v620 = vunpack.c.l.b16 %v612
        %v621 = vunpack.c.h.b16 %v612
        %v622 = vunpack.c.l.b16 %v613
        %v623 = vunpack.c.h.b16 %v613
        %v624 = vunpack.c.l.b16 %v614
        %v625 = vunpack.c.h.b16 %v614
        %v626 = vunpack.c.l.b16 %v615
        %v627 = vunpack.c.h.b16 %v615
        %v628 = vpack.c.b16 %v620, %v620
        %v629 = vpack.c.b16 %v621, %v621
        %v630 = vpack.c.b16 %v622, %v622
        %v631 = vpack.c.b16 %v623, %v623
        %v632 = vpack.c.b16 %v624, %v624
        %v633 = vpack.c.b16 %v625, %v625
        %v634 = vpack.c.b16 %v626, %v626
        %v635 = vpack.c.b16 %v627, %v627
        %vm644 = vcmask 257024
        %645 = vst.msk [vmem:[%s567] sm:$0xf] %vm644, %v628
        %646 = vst.msk [vmem:[%s567 + $0x4] sm:$0xf] %vm644, %v629
        %647 = vst.msk [vmem:[%s567 + $0x8] sm:$0xf] %vm644, %v630
        %648 = vst.msk [vmem:[%s567 + $0xc] sm:$0xf] %vm644, %v631
        %649 = vst.msk [vmem:[%s567 + $0x10] sm:$0xf] %vm644, %v632
        %650 = vst.msk [vmem:[%s567 + $0x14] sm:$0xf] %vm644, %v633
        %651 = vst.msk [vmem:[%s567 + $0x18] sm:$0xf] %vm644, %v634
        %652 = vst.msk [vmem:[%s567 + $0x1c] sm:$0xf] %vm644, %v635
        %v653 = vrot.slane %v581, 1
        %v654 = vor.u32 %v578, %v653
        %v655 = vrot.slane %v588, 1
        %v656 = vor.u32 %v585, %v655
        %v657 = vrot.slane %v595, 1
        %v658 = vor.u32 %v592, %v657
        %v659 = vrot.slane %v602, 1
        %v660 = vor.u32 %v599, %v659
        %vm665 = vcmask 1047552
        %vm666 = vsmask.f32 7424
        %vm667 = vmand %vm665, %vm666
        %v668 = vsel %vm667, %v654, 0
        %v669 = vsel %vm667, %v656, 0
        %v670 = vsel %vm667, %v658, 0
        %v671 = vsel %vm667, %v660, 0
        %v676 = vunpack.c.l.b16 %v668
        %v677 = vunpack.c.h.b16 %v668
        %v678 = vunpack.c.l.b16 %v669
        %v679 = vunpack.c.h.b16 %v669
        %v680 = vunpack.c.l.b16 %v670
        %v681 = vunpack.c.h.b16 %v670
        %v682 = vunpack.c.l.b16 %v671
        %v683 = vunpack.c.h.b16 %v671
        %v684 = vpack.c.b16 %v676, %v676
        %v685 = vpack.c.b16 %v677, %v677
        %v686 = vpack.c.b16 %v678, %v678
        %v687 = vpack.c.b16 %v679, %v679
        %v688 = vpack.c.b16 %v680, %v680
        %v689 = vpack.c.b16 %v681, %v681
        %v690 = vpack.c.b16 %v682, %v682
        %v691 = vpack.c.b16 %v683, %v683
        %692 = vrot.lane.b32.xlu0 %v684, 64
        %v693 = vpop.permute.xlu0 %692
        %694 = vrot.lane.b32.xlu0 %v685, 64
        %v695 = vpop.permute.xlu0 %694
        %696 = vrot.lane.b32.xlu0 %v686, 64
        %v697 = vpop.permute.xlu0 %696
        %698 = vrot.lane.b32.xlu0 %v687, 64
        %v699 = vpop.permute.xlu0 %698
        %700 = vrot.lane.b32.xlu0 %v688, 64
        %v701 = vpop.permute.xlu0 %700
        %702 = vrot.lane.b32.xlu0 %v689, 64
        %v703 = vpop.permute.xlu0 %702
        %704 = vrot.lane.b32.xlu0 %v690, 64
        %v705 = vpop.permute.xlu0 %704
        %706 = vrot.lane.b32.xlu0 %v691, 64
        %v707 = vpop.permute.xlu0 %706
        %vm716 = vcmask 781824
        %717 = vst.msk [vmem:[%s567] sm:$0xf] %vm716, %v693
        %718 = vst.msk [vmem:[%s567 + $0x4] sm:$0xf] %vm716, %v695
        %719 = vst.msk [vmem:[%s567 + $0x8] sm:$0xf] %vm716, %v697
        %720 = vst.msk [vmem:[%s567 + $0xc] sm:$0xf] %vm716, %v699
        %721 = vst.msk [vmem:[%s567 + $0x10] sm:$0xf] %vm716, %v701
        %722 = vst.msk [vmem:[%s567 + $0x14] sm:$0xf] %vm716, %v703
        %723 = vst.msk [vmem:[%s567 + $0x18] sm:$0xf] %vm716, %v705
        %724 = vst.msk [vmem:[%s567 + $0x1c] sm:$0xf] %vm716, %v707
        %p725 = scmp.eq.s32.totalorder %s30, 3
        // Predicated region
        $region61: #{tpu_custom_call.1} parent=39 // pred_check
          %p726 = pneg %p725
        $region62: #{tpu_custom_call.1} parent=39 // pred_check_branch
          %728 = sbr.rel (%p726) target = $region64
        $region63: #{tpu_custom_call.1} parent=39 // pred_region
          %s729 = scalar_lea.vmem [#allocation2], 48
          %vm730 = vcmask 781312
          %731 = vst.msk [vmem:[%s729] sm:$0xf] %vm730, 0
          %732 = vst.msk [vmem:[%s729 + $0x4] sm:$0xf] %vm730, 0
          %733 = vst.msk [vmem:[%s729 + $0x8] sm:$0xf] %vm730, 0
          %734 = vst.msk [vmem:[%s729 + $0xc] sm:$0xf] %vm730, 0
        $region64: #{tpu_custom_call.1} parent=39 // pred_fallthru
          _
        %p735 = scmp.lt.s32.totalorder %s30, 3
        // Predicated region
        $region65: #{tpu_custom_call.1} parent=39 // pred_check
          %p736 = pneg %p735
        $region66: #{tpu_custom_call.1} parent=39 // pred_check_branch
          %738 = sbr.rel (%p736) target = $region68
        $region67: #{tpu_custom_call.1} parent=39 // pred_region
          %v739 = vld [vmem:[%s336] sm:$0xff]
          %v740 = vld [vmem:[%s336 + $0x8] sm:$0xff]
          %v741 = vld [vmem:[%s336 + $0x10] sm:$0xff]
          %v742 = vld [vmem:[%s336 + $0x18] sm:$0xff]
          %v743 = vpack.c.bf16 %v740, %v739
          %v744 = vpack.c.bf16 %v742, %v741
          %v747 = vunpack.c.l.b16 %v743
          %v748 = vunpack.c.h.b16 %v743
          %v749 = vunpack.c.l.b16 %v744
          %v750 = vunpack.c.h.b16 %v744
          %v751 = vpack.c.b16 %v747, %v747
          %v752 = vpack.c.b16 %v748, %v748
          %v753 = vpack.c.b16 %v749, %v749
          %v754 = vpack.c.b16 %v750, %v750
          %755 = vrot.lane.b32.xlu0 %v751, 32
          %v756 = vpop.permute.xlu0 %755
          %757 = vrot.lane.b32.xlu0 %v752, 32
          %v758 = vpop.permute.xlu0 %757
          %759 = vrot.lane.b32.xlu0 %v753, 32
          %v760 = vpop.permute.xlu0 %759
          %761 = vrot.lane.b32.xlu0 %v754, 32
          %v762 = vpop.permute.xlu0 %761
          %s767 = scalar_lea.vmem [#allocation2], 48
          %768 = vst.msk [vmem:[%s767] sm:$0xf] %vm568, %v756
          %769 = vst.msk [vmem:[%s767 + $0x4] sm:$0xf] %vm568, %v758
          %770 = vst.msk [vmem:[%s767 + $0x8] sm:$0xf] %vm568, %v760
          %771 = vst.msk [vmem:[%s767 + $0xc] sm:$0xf] %vm568, %v762
          %v773 = vshrl.u32 %v743, 16
          %v775 = vrot.slane %v773, 7
          %v776 = vshll.u32 %v743, 16
          %v778 = vor.u32 %v775, %v776
          %v780 = vshrl.u32 %v744, 16
          %v782 = vrot.slane %v780, 7
          %v783 = vshll.u32 %v744, 16
          %v785 = vor.u32 %v782, %v783
          %v788 = vsel %vm611, 0, %v778
          %v789 = vsel %vm611, 0, %v785
          %v792 = vunpack.c.l.b16 %v788
          %v793 = vunpack.c.h.b16 %v788
          %v794 = vunpack.c.l.b16 %v789
          %v795 = vunpack.c.h.b16 %v789
          %v796 = vpack.c.b16 %v792, %v792
          %v797 = vpack.c.b16 %v793, %v793
          %v798 = vpack.c.b16 %v794, %v794
          %v799 = vpack.c.b16 %v795, %v795
          %804 = vst.msk [vmem:[%s767] sm:$0xf] %vm644, %v796
          %805 = vst.msk [vmem:[%s767 + $0x4] sm:$0xf] %vm644, %v797
          %806 = vst.msk [vmem:[%s767 + $0x8] sm:$0xf] %vm644, %v798
          %807 = vst.msk [vmem:[%s767 + $0xc] sm:$0xf] %vm644, %v799
          %v808 = vrot.slane %v776, 1
          %v809 = vor.u32 %v773, %v808
          %v810 = vrot.slane %v783, 1
          %v811 = vor.u32 %v780, %v810
          %v814 = vsel %vm667, %v809, 0
          %v815 = vsel %vm667, %v811, 0
          %v818 = vunpack.c.l.b16 %v814
          %v819 = vunpack.c.h.b16 %v814
          %v820 = vunpack.c.l.b16 %v815
          %v821 = vunpack.c.h.b16 %v815
          %v822 = vpack.c.b16 %v818, %v818
          %v823 = vpack.c.b16 %v819, %v819
          %v824 = vpack.c.b16 %v820, %v820
          %v825 = vpack.c.b16 %v821, %v821
          %826 = vrot.lane.b32.xlu0 %v822, 64
          %v827 = vpop.permute.xlu0 %826
          %828 = vrot.lane.b32.xlu0 %v823, 64
          %v829 = vpop.permute.xlu0 %828
          %830 = vrot.lane.b32.xlu0 %v824, 64
          %v831 = vpop.permute.xlu0 %830
          %832 = vrot.lane.b32.xlu0 %v825, 64
          %v833 = vpop.permute.xlu0 %832
          %838 = vst.msk [vmem:[%s767] sm:$0xf] %vm716, %v827
          %839 = vst.msk [vmem:[%s767 + $0x4] sm:$0xf] %vm716, %v829
          %840 = vst.msk [vmem:[%s767 + $0x8] sm:$0xf] %vm716, %v831
          %841 = vst.msk [vmem:[%s767 + $0xc] sm:$0xf] %vm716, %v833
        $region68: #{tpu_custom_call.1} parent=39 // pred_fallthru
          _
        %v842 = vld [vmem:[#allocation2] sm:$0xf]
        %v843 = vld [vmem:[#allocation2 + $0x4] sm:$0xf]
        %v844 = vld [vmem:[#allocation2 + $0x8] sm:$0xf]
        %v845 = vld [vmem:[#allocation2 + $0xc] sm:$0xf]
        %v846 = vld [vmem:[#allocation2 + $0x10] sm:$0xf]
        %v847 = vld [vmem:[#allocation2 + $0x14] sm:$0xf]
        %v848 = vld [vmem:[#allocation2 + $0x18] sm:$0xf]
        %v849 = vld [vmem:[#allocation2 + $0x1c] sm:$0xf]
        %v850 = vld [vmem:[#allocation2 + $0x20] sm:$0xf]
        %v851 = vld [vmem:[#allocation2 + $0x24] sm:$0xf]
        %v852 = vld [vmem:[#allocation2 + $0x28] sm:$0xf]
        %v853 = vld [vmem:[#allocation2 + $0x2c] sm:$0xf]
        %v854 = vld [vmem:[%s3] sm:$0xf]
        %v855 = vld [vmem:[%s3 + $0x4] sm:$0xf]
        %v856 = vld [vmem:[%s3 + $0x8] sm:$0xf]
        %v857 = vld [vmem:[%s3 + $0xc] sm:$0xf]
        %v858 = vld [vmem:[%s3 + $0x10] sm:$0xf]
        %v859 = vld [vmem:[%s3 + $0x14] sm:$0xf]
        %v860 = vld [vmem:[%s3 + $0x18] sm:$0xf]
        %v861 = vld [vmem:[%s3 + $0x1c] sm:$0xf]
        %v862 = vld [vmem:[%s3 + $0x20] sm:$0xf]
        %v863 = vld [vmem:[%s3 + $0x24] sm:$0xf]
        %v864 = vld [vmem:[%s3 + $0x28] sm:$0xf]
        %v865 = vld [vmem:[%s3 + $0x2c] sm:$0xf]
        %s866 = scalar_lea.vmem [#allocation2], 8
        %v867 = vld [vmem:[%s866] sm:$0xf]
        %v868 = vld [vmem:[%s866 + $0x4] sm:$0xf]
        %v869 = vld [vmem:[%s866 + $0x8] sm:$0xf]
        %v870 = vld [vmem:[%s866 + $0xc] sm:$0xf]
        %v871 = vld [vmem:[%s866 + $0x10] sm:$0xf]
        %v872 = vld [vmem:[%s866 + $0x14] sm:$0xf]
        %v873 = vld [vmem:[%s866 + $0x18] sm:$0xf]
        %v874 = vld [vmem:[%s866 + $0x1c] sm:$0xf]
        %v875 = vld [vmem:[%s866 + $0x20] sm:$0xf]
        %v876 = vld [vmem:[%s866 + $0x24] sm:$0xf]
        %v877 = vld [vmem:[%s866 + $0x28] sm:$0xf]
        %v878 = vld [vmem:[%s866 + $0x2c] sm:$0xf]
        %s879 = scalar_lea.vmem %s3, 48
        %v880 = vld [vmem:[%s879] sm:$0xf]
        %v881 = vld [vmem:[%s879 + $0x4] sm:$0xf]
        %v882 = vld [vmem:[%s879 + $0x8] sm:$0xf]
        %v883 = vld [vmem:[%s879 + $0xc] sm:$0xf]
        %v884 = vld [vmem:[%s879 + $0x10] sm:$0xf]
        %v885 = vld [vmem:[%s879 + $0x14] sm:$0xf]
        %v886 = vld [vmem:[%s879 + $0x18] sm:$0xf]
        %v887 = vld [vmem:[%s879 + $0x1c] sm:$0xf]
        %v888 = vld [vmem:[%s879 + $0x20] sm:$0xf]
        %v889 = vld [vmem:[%s879 + $0x24] sm:$0xf]
        %v890 = vld [vmem:[%s879 + $0x28] sm:$0xf]
        %v891 = vld [vmem:[%s879 + $0x2c] sm:$0xf]
        %v904 = vunpack.c.l.b16 %v867
        %v905 = vunpack.c.l.b16 %v868
        %v906 = vunpack.c.l.b16 %v869
        %v907 = vunpack.c.l.b16 %v870
        %v908 = vunpack.c.l.b16 %v871
        %v909 = vunpack.c.l.b16 %v872
        %v910 = vunpack.c.l.b16 %v873
        %v911 = vunpack.c.l.b16 %v874
        %v912 = vunpack.c.l.b16 %v875
        %v913 = vunpack.c.l.b16 %v876
        %v914 = vunpack.c.l.b16 %v877
        %v915 = vunpack.c.l.b16 %v878
        %v916 = vpack.c.b16 %v905, %v904
        %v917 = vpack.c.b16 %v907, %v906
        %v918 = vpack.c.b16 %v909, %v908
        %v919 = vpack.c.b16 %v911, %v910
        %v920 = vpack.c.b16 %v913, %v912
        %v921 = vpack.c.b16 %v915, %v914
        %v934 = vunpack.c.l.b16 %v880
        %v935 = vunpack.c.l.b16 %v881
        %v936 = vunpack.c.l.b16 %v882
        %v937 = vunpack.c.l.b16 %v883
        %v938 = vunpack.c.l.b16 %v884
        %v939 = vunpack.c.l.b16 %v885
        %v940 = vunpack.c.l.b16 %v886
        %v941 = vunpack.c.l.b16 %v887
        %v942 = vunpack.c.l.b16 %v888
        %v943 = vunpack.c.l.b16 %v889
        %v944 = vunpack.c.l.b16 %v890
        %v945 = vunpack.c.l.b16 %v891
        %v946 = vpack.c.b16 %v935, %v934
        %v947 = vpack.c.b16 %v937, %v936
        %v948 = vpack.c.b16 %v939, %v938
        %v949 = vpack.c.b16 %v941, %v940
        %v950 = vpack.c.b16 %v943, %v942
        %v951 = vpack.c.b16 %v945, %v944
        %vm958 = vcmask 785408
        %v960 = vsel %vm958, %v916, 0
        %v963 = vsel %vm958, %v917, 0
        %v966 = vsel %vm958, %v918, 0
        %v969 = vsel %vm958, %v919, 0
        %v972 = vsel %vm958, %v920, 0
        %v975 = vsel %vm958, %v921, 0
        %977 = vmatprep.subr.bf16.mxu0 0
        %978 = vmatpush1.bf16.msra.mxu0 0
        %979 = vmatprep.subr.bf16.mxu0 0
        %980 = vmatpush1.bf16.msra.mxu0 0
        %981 = vmatprep.subr.bf16.mxu0 0
        %982 = vmatpush1.bf16.msra.mxu0 %v951
        %983 = vmatprep.subr.bf16.mxu0 0
        %984 = vmatpush1.bf16.msra.mxu0 %v950
        %985 = vmatprep.subr.bf16.mxu0 0
        %986 = vmatpush1.bf16.msra.mxu0 %v949
        %987 = vmatprep.subr.bf16.mxu0 0
        %988 = vmatpush1.bf16.msra.mxu0 %v948
        %989 = vmatprep.subr.bf16.mxu0 0
        %990 = vmatpush1.bf16.msra.mxu0 %v947
        %991 = vmatprep.subr.bf16.mxu0 0
        %992 = vmatpush1.bf16.msra.mxu0 %v946
        %993 = vmatprep.subr.bf16.mxu0 0
        %994 = vmatpush2.bf16.msra.mxu0 0
        %995 = vmatprep.subr.bf16.mxu0 0
        %996 = vmatpush2.bf16.msra.mxu0 0
        %997 = vmatprep.subr.bf16.mxu0 0
        %998 = vmatpush2.bf16.msra.mxu0 0
        %999 = vmatprep.subr.bf16.mxu0 0
        %1000 = vmatpush2.bf16.msra.mxu0 0
        %1001 = vmatprep.subr.bf16.mxu0 0
        %1002 = vmatpush2.bf16.msra.mxu0 0
        %1003 = vmatprep.subr.bf16.mxu0 0
        %1004 = vmatpush2.bf16.msra.mxu0 0
        %1005 = vmatprep.subr.bf16.mxu0 0
        %1006 = vmatpush2.bf16.msra.mxu0 0
        %1007 = vmatprep.subr.bf16.mxu0 0
        %1008 = vmatpush2.bf16.msra.mxu0 0
        %1009 = vmatprep.mubr.bf16.mxu0 0
        %1010 = vmatmul.mubr.bf16.gmra.mxu0 %v960
        %v1011 = vpop.f32.mrf.mxu0
        %v1012 = vadd.f32 0.0, %v1011
        %v1013 = vpop.f32.mrf.mxu0
        %v1014 = vpop.f32.mrf.mxu0
        %v1015 = vadd.f32 0.0, %v1014
        %v1016 = vpop.f32.mrf.mxu0
        %1017 = vmatprep.mubr.bf16.mxu0 0
        %1018 = vmatmul.mubr.bf16.gmra.mxu0 %v963
        %v1019 = vpop.f32.mrf.mxu0
        %v1020 = vadd.f32 0.0, %v1019
        %v1021 = vpop.f32.mrf.mxu0
        %v1022 = vpop.f32.mrf.mxu0
        %v1023 = vadd.f32 0.0, %v1022
        %v1024 = vpop.f32.mrf.mxu0
        %1025 = vmatprep.mubr.bf16.mxu0 0
        %1026 = vmatmul.mubr.bf16.gmra.mxu0 %v966
        %v1027 = vpop.f32.mrf.mxu0
        %v1028 = vadd.f32 0.0, %v1027
        %v1029 = vpop.f32.mrf.mxu0
        %v1030 = vpop.f32.mrf.mxu0
        %v1031 = vadd.f32 0.0, %v1030
        %v1032 = vpop.f32.mrf.mxu0
        %1033 = vmatprep.mubr.bf16.mxu0 0
        %1034 = vmatmul.mubr.bf16.gmra.mxu0 %v969
        %v1035 = vpop.f32.mrf.mxu0
        %v1036 = vadd.f32 0.0, %v1035
        %v1037 = vpop.f32.mrf.mxu0
        %v1038 = vpop.f32.mrf.mxu0
        %v1039 = vadd.f32 0.0, %v1038
        %v1040 = vpop.f32.mrf.mxu0
        %1041 = vmatprep.mubr.bf16.mxu0 0
        %1042 = vmatmul.mubr.bf16.gmra.mxu0 %v972
        %v1043 = vpop.f32.mrf.mxu0
        %v1044 = vadd.f32 0.0, %v1043
        %v1045 = vpop.f32.mrf.mxu0
        %v1046 = vpop.f32.mrf.mxu0
        %v1047 = vadd.f32 0.0, %v1046
        %v1048 = vpop.f32.mrf.mxu0
        %1049 = vmatprep.mubr.bf16.mxu0 0
        %1050 = vmatmul.mubr.bf16.gmra.mxu0 %v975
        %v1051 = vpop.f32.mrf.mxu0
        %v1052 = vadd.f32 0.0, %v1051
        %v1053 = vpop.f32.mrf.mxu0
        %v1054 = vpop.f32.mrf.mxu0
        %v1055 = vadd.f32 0.0, %v1054
        %v1056 = vpop.f32.mrf.mxu0
        %1057 = vdwg.mxu0
        %v1070 = vunpack.c.l.b16 %v842
        %v1071 = vunpack.c.l.b16 %v843
        %v1072 = vunpack.c.l.b16 %v844
        %v1073 = vunpack.c.l.b16 %v845
        %v1074 = vunpack.c.l.b16 %v846
        %v1075 = vunpack.c.l.b16 %v847
        %v1076 = vunpack.c.l.b16 %v848
        %v1077 = vunpack.c.l.b16 %v849
        %v1078 = vunpack.c.l.b16 %v850
        %v1079 = vunpack.c.l.b16 %v851
        %v1080 = vunpack.c.l.b16 %v852
        %v1081 = vunpack.c.l.b16 %v853
        %v1082 = vpack.c.b16 %v1071, %v1070
        %v1083 = vpack.c.b16 %v1073, %v1072
        %v1084 = vpack.c.b16 %v1075, %v1074
        %v1085 = vpack.c.b16 %v1077, %v1076
        %v1086 = vpack.c.b16 %v1079, %v1078
        %v1087 = vpack.c.b16 %v1081, %v1080
        %v1100 = vunpack.c.l.b16 %v854
        %v1101 = vunpack.c.l.b16 %v855
        %v1102 = vunpack.c.l.b16 %v856
        %v1103 = vunpack.c.l.b16 %v857
        %v1104 = vunpack.c.l.b16 %v858
        %v1105 = vunpack.c.l.b16 %v859
        %v1106 = vunpack.c.l.b16 %v860
        %v1107 = vunpack.c.l.b16 %v861
        %v1108 = vunpack.c.l.b16 %v862
        %v1109 = vunpack.c.l.b16 %v863
        %v1110 = vunpack.c.l.b16 %v864
        %v1111 = vunpack.c.l.b16 %v865
        %v1112 = vpack.c.b16 %v1101, %v1100
        %v1113 = vpack.c.b16 %v1103, %v1102
        %v1114 = vpack.c.b16 %v1105, %v1104
        %v1115 = vpack.c.b16 %v1107, %v1106
        %v1116 = vpack.c.b16 %v1109, %v1108
        %v1117 = vpack.c.b16 %v1111, %v1110
        %v1125 = vsel %vm958, %v1082, 0
        %v1128 = vsel %vm958, %v1083, 0
        %v1131 = vsel %vm958, %v1084, 0
        %v1134 = vsel %vm958, %v1085, 0
        %v1137 = vsel %vm958, %v1086, 0
        %v1140 = vsel %vm958, %v1087, 0
        %1142 = vmatprep.subr.bf16.mxu0 0
        %1143 = vmatpush1.bf16.msra.mxu0 0
        %1144 = vmatprep.subr.bf16.mxu0 0
        %1145 = vmatpush1.bf16.msra.mxu0 0
        %1146 = vmatprep.subr.bf16.mxu0 0
        %1147 = vmatpush1.bf16.msra.mxu0 %v1117
        %1148 = vmatprep.subr.bf16.mxu0 0
        %1149 = vmatpush1.bf16.msra.mxu0 %v1116
        %1150 = vmatprep.subr.bf16.mxu0 0
        %1151 = vmatpush1.bf16.msra.mxu0 %v1115
        %1152 = vmatprep.subr.bf16.mxu0 0
        %1153 = vmatpush1.bf16.msra.mxu0 %v1114
        %1154 = vmatprep.subr.bf16.mxu0 0
        %1155 = vmatpush1.bf16.msra.mxu0 %v1113
        %1156 = vmatprep.subr.bf16.mxu0 0
        %1157 = vmatpush1.bf16.msra.mxu0 %v1112
        %1158 = vmatprep.subr.bf16.mxu0 0
        %1159 = vmatpush2.bf16.msra.mxu0 0
        %1160 = vmatprep.subr.bf16.mxu0 0
        %1161 = vmatpush2.bf16.msra.mxu0 0
        %1162 = vmatprep.subr.bf16.mxu0 0
        %1163 = vmatpush2.bf16.msra.mxu0 0
        %1164 = vmatprep.subr.bf16.mxu0 0
        %1165 = vmatpush2.bf16.msra.mxu0 0
        %1166 = vmatprep.subr.bf16.mxu0 0
        %1167 = vmatpush2.bf16.msra.mxu0 0
        %1168 = vmatprep.subr.bf16.mxu0 0
        %1169 = vmatpush2.bf16.msra.mxu0 0
        %1170 = vmatprep.subr.bf16.mxu0 0
        %1171 = vmatpush2.bf16.msra.mxu0 0
        %1172 = vmatprep.subr.bf16.mxu0 0
        %1173 = vmatpush2.bf16.msra.mxu0 0
        %1174 = vmatprep.mubr.bf16.mxu0 0
        %1175 = vmatmul.mubr.bf16.gmra.mxu0 %v1125
        %v1176 = vpop.f32.mrf.mxu0
        %v1177 = vadd.f32 %v1012, %v1176
        %v1178 = vpop.f32.mrf.mxu0
        %v1179 = vpop.f32.mrf.mxu0
        %v1180 = vadd.f32 %v1015, %v1179
        %v1181 = vpop.f32.mrf.mxu0
        %1182 = vmatprep.mubr.bf16.mxu0 0
        %1183 = vmatmul.mubr.bf16.gmra.mxu0 %v1128
        %v1184 = vpop.f32.mrf.mxu0
        %v1185 = vadd.f32 %v1020, %v1184
        %v1186 = vpop.f32.mrf.mxu0
        %v1187 = vpop.f32.mrf.mxu0
        %v1188 = vadd.f32 %v1023, %v1187
        %v1189 = vpop.f32.mrf.mxu0
        %1190 = vmatprep.mubr.bf16.mxu0 0
        %1191 = vmatmul.mubr.bf16.gmra.mxu0 %v1131
        %v1192 = vpop.f32.mrf.mxu0
        %v1193 = vadd.f32 %v1028, %v1192
        %v1194 = vpop.f32.mrf.mxu0
        %v1195 = vpop.f32.mrf.mxu0
        %v1196 = vadd.f32 %v1031, %v1195
        %v1197 = vpop.f32.mrf.mxu0
        %1198 = vmatprep.mubr.bf16.mxu0 0
        %1199 = vmatmul.mubr.bf16.gmra.mxu0 %v1134
        %v1200 = vpop.f32.mrf.mxu0
        %v1201 = vadd.f32 %v1036, %v1200
        %v1202 = vpop.f32.mrf.mxu0
        %v1203 = vpop.f32.mrf.mxu0
        %v1204 = vadd.f32 %v1039, %v1203
        %v1205 = vpop.f32.mrf.mxu0
        %1206 = vmatprep.mubr.bf16.mxu0 0
        %1207 = vmatmul.mubr.bf16.gmra.mxu0 %v1137
        %v1208 = vpop.f32.mrf.mxu0
        %v1209 = vadd.f32 %v1044, %v1208
        %v1210 = vpop.f32.mrf.mxu0
        %v1211 = vpop.f32.mrf.mxu0
        %v1212 = vadd.f32 %v1047, %v1211
        %v1213 = vpop.f32.mrf.mxu0
        %1214 = vmatprep.mubr.bf16.mxu0 0
        %1215 = vmatmul.mubr.bf16.gmra.mxu0 %v1140
        %v1216 = vpop.f32.mrf.mxu0
        %v1217 = vadd.f32 %v1052, %v1216
        %v1218 = vpop.f32.mrf.mxu0
        %v1219 = vpop.f32.mrf.mxu0
        %v1220 = vadd.f32 %v1055, %v1219
        %v1221 = vpop.f32.mrf.mxu0
        %1222 = vdwg.mxu0
        %v1223 = vld [vmem:[%s567] sm:$0xf]
        %v1224 = vld [vmem:[%s567 + $0x4] sm:$0xf]
        %v1225 = vld [vmem:[%s567 + $0x8] sm:$0xf]
        %v1226 = vld [vmem:[%s567 + $0xc] sm:$0xf]
        %v1227 = vld [vmem:[%s567 + $0x10] sm:$0xf]
        %v1228 = vld [vmem:[%s567 + $0x14] sm:$0xf]
        %v1229 = vld [vmem:[%s567 + $0x18] sm:$0xf]
        %v1230 = vld [vmem:[%s567 + $0x1c] sm:$0xf]
        %v1231 = vld [vmem:[%s567 + $0x20] sm:$0xf]
        %v1232 = vld [vmem:[%s567 + $0x24] sm:$0xf]
        %v1233 = vld [vmem:[%s567 + $0x28] sm:$0xf]
        %v1234 = vld [vmem:[%s567 + $0x2c] sm:$0xf]
        %s1235 = scalar_lea.vmem %s3, 96
        %v1236 = vld [vmem:[%s1235] sm:$0xf]
        %v1237 = vld [vmem:[%s1235 + $0x4] sm:$0xf]
        %v1238 = vld [vmem:[%s1235 + $0x8] sm:$0xf]
        %v1239 = vld [vmem:[%s1235 + $0xc] sm:$0xf]
        %v1240 = vld [vmem:[%s1235 + $0x10] sm:$0xf]
        %v1241 = vld [vmem:[%s1235 + $0x14] sm:$0xf]
        %v1242 = vld [vmem:[%s1235 + $0x18] sm:$0xf]
        %v1243 = vld [vmem:[%s1235 + $0x1c] sm:$0xf]
        %v1244 = vld [vmem:[%s1235 + $0x20] sm:$0xf]
        %v1245 = vld [vmem:[%s1235 + $0x24] sm:$0xf]
        %v1246 = vld [vmem:[%s1235 + $0x28] sm:$0xf]
        %v1247 = vld [vmem:[%s1235 + $0x2c] sm:$0xf]
        %v1260 = vunpack.c.l.b16 %v1223
        %v1261 = vunpack.c.l.b16 %v1224
        %v1262 = vunpack.c.l.b16 %v1225
        %v1263 = vunpack.c.l.b16 %v1226
        %v1264 = vunpack.c.l.b16 %v1227
        %v1265 = vunpack.c.l.b16 %v1228
        %v1266 = vunpack.c.l.b16 %v1229
        %v1267 = vunpack.c.l.b16 %v1230
        %v1268 = vunpack.c.l.b16 %v1231
        %v1269 = vunpack.c.l.b16 %v1232
        %v1270 = vunpack.c.l.b16 %v1233
        %v1271 = vunpack.c.l.b16 %v1234
        %v1272 = vpack.c.b16 %v1261, %v1260
        %v1273 = vpack.c.b16 %v1263, %v1262
        %v1274 = vpack.c.b16 %v1265, %v1264
        %v1275 = vpack.c.b16 %v1267, %v1266
        %v1276 = vpack.c.b16 %v1269, %v1268
        %v1277 = vpack.c.b16 %v1271, %v1270
        %v1290 = vunpack.c.l.b16 %v1236
        %v1291 = vunpack.c.l.b16 %v1237
        %v1292 = vunpack.c.l.b16 %v1238
        %v1293 = vunpack.c.l.b16 %v1239
        %v1294 = vunpack.c.l.b16 %v1240
        %v1295 = vunpack.c.l.b16 %v1241
        %v1296 = vunpack.c.l.b16 %v1242
        %v1297 = vunpack.c.l.b16 %v1243
        %v1298 = vunpack.c.l.b16 %v1244
        %v1299 = vunpack.c.l.b16 %v1245
        %v1300 = vunpack.c.l.b16 %v1246
        %v1301 = vunpack.c.l.b16 %v1247
        %v1302 = vpack.c.b16 %v1291, %v1290
        %v1303 = vpack.c.b16 %v1293, %v1292
        %v1304 = vpack.c.b16 %v1295, %v1294
        %v1305 = vpack.c.b16 %v1297, %v1296
        %v1306 = vpack.c.b16 %v1299, %v1298
        %v1307 = vpack.c.b16 %v1301, %v1300
        %v1315 = vsel %vm958, %v1272, 0
        %v1318 = vsel %vm958, %v1273, 0
        %v1321 = vsel %vm958, %v1274, 0
        %v1324 = vsel %vm958, %v1275, 0
        %v1327 = vsel %vm958, %v1276, 0
        %v1330 = vsel %vm958, %v1277, 0
        %1332 = vmatprep.subr.bf16.mxu0 0
        %1333 = vmatpush1.bf16.msra.mxu0 0
        %1334 = vmatprep.subr.bf16.mxu0 0
        %1335 = vmatpush1.bf16.msra.mxu0 0
        %1336 = vmatprep.subr.bf16.mxu0 0
        %1337 = vmatpush1.bf16.msra.mxu0 %v1307
        %1338 = vmatprep.subr.bf16.mxu0 0
        %1339 = vmatpush1.bf16.msra.mxu0 %v1306
        %1340 = vmatprep.subr.bf16.mxu0 0
        %1341 = vmatpush1.bf16.msra.mxu0 %v1305
        %1342 = vmatprep.subr.bf16.mxu0 0
        %1343 = vmatpush1.bf16.msra.mxu0 %v1304
        %1344 = vmatprep.subr.bf16.mxu0 0
        %1345 = vmatpush1.bf16.msra.mxu0 %v1303
        %1346 = vmatprep.subr.bf16.mxu0 0
        %1347 = vmatpush1.bf16.msra.mxu0 %v1302
        %1348 = vmatprep.subr.bf16.mxu0 0
        %1349 = vmatpush2.bf16.msra.mxu0 0
        %1350 = vmatprep.subr.bf16.mxu0 0
        %1351 = vmatpush2.bf16.msra.mxu0 0
        %1352 = vmatprep.subr.bf16.mxu0 0
        %1353 = vmatpush2.bf16.msra.mxu0 0
        %1354 = vmatprep.subr.bf16.mxu0 0
        %1355 = vmatpush2.bf16.msra.mxu0 0
        %1356 = vmatprep.subr.bf16.mxu0 0
        %1357 = vmatpush2.bf16.msra.mxu0 0
        %1358 = vmatprep.subr.bf16.mxu0 0
        %1359 = vmatpush2.bf16.msra.mxu0 0
        %1360 = vmatprep.subr.bf16.mxu0 0
        %1361 = vmatpush2.bf16.msra.mxu0 0
        %1362 = vmatprep.subr.bf16.mxu0 0
        %1363 = vmatpush2.bf16.msra.mxu0 0
        %1364 = vmatprep.mubr.bf16.mxu0 0
        %1365 = vmatmul.mubr.bf16.gmra.mxu0 %v1315
        %v1366 = vpop.f32.mrf.mxu0
        %v1367 = vadd.f32 0.0, %v1366
        %v1368 = vpop.f32.mrf.mxu0
        %v1369 = vpop.f32.mrf.mxu0
        %v1370 = vadd.f32 0.0, %v1369
        %v1371 = vpop.f32.mrf.mxu0
        %1372 = vmatprep.mubr.bf16.mxu0 0
        %1373 = vmatmul.mubr.bf16.gmra.mxu0 %v1318
        %v1374 = vpop.f32.mrf.mxu0
        %v1375 = vadd.f32 0.0, %v1374
        %v1376 = vpop.f32.mrf.mxu0
        %v1377 = vpop.f32.mrf.mxu0
        %v1378 = vadd.f32 0.0, %v1377
        %v1379 = vpop.f32.mrf.mxu0
        %1380 = vmatprep.mubr.bf16.mxu0 0
        %1381 = vmatmul.mubr.bf16.gmra.mxu0 %v1321
        %v1382 = vpop.f32.mrf.mxu0
        %v1383 = vadd.f32 0.0, %v1382
        %v1384 = vpop.f32.mrf.mxu0
        %v1385 = vpop.f32.mrf.mxu0
        %v1386 = vadd.f32 0.0, %v1385
        %v1387 = vpop.f32.mrf.mxu0
        %1388 = vmatprep.mubr.bf16.mxu0 0
        %1389 = vmatmul.mubr.bf16.gmra.mxu0 %v1324
        %v1390 = vpop.f32.mrf.mxu0
        %v1391 = vadd.f32 0.0, %v1390
        %v1392 = vpop.f32.mrf.mxu0
        %v1393 = vpop.f32.mrf.mxu0
        %v1394 = vadd.f32 0.0, %v1393
        %v1395 = vpop.f32.mrf.mxu0
        %1396 = vmatprep.mubr.bf16.mxu0 0
        %1397 = vmatmul.mubr.bf16.gmra.mxu0 %v1327
        %v1398 = vpop.f32.mrf.mxu0
        %v1399 = vadd.f32 0.0, %v1398
        %v1400 = vpop.f32.mrf.mxu0
        %v1401 = vpop.f32.mrf.mxu0
        %v1402 = vadd.f32 0.0, %v1401
        %v1403 = vpop.f32.mrf.mxu0
        %1404 = vmatprep.mubr.bf16.mxu0 0
        %1405 = vmatmul.mubr.bf16.gmra.mxu0 %v1330
        %v1406 = vpop.f32.mrf.mxu0
        %v1407 = vadd.f32 0.0, %v1406
        %v1408 = vpop.f32.mrf.mxu0
        %v1409 = vpop.f32.mrf.mxu0
        %v1410 = vadd.f32 0.0, %v1409
        %v1411 = vpop.f32.mrf.mxu0
        %1412 = vdwg.mxu0
        %v1413 = vadd.f32 %v1177, %v1367
        %v1414 = vadd.f32 %v1180, %v1370
        %v1415 = vadd.f32 %v1185, %v1375
        %v1416 = vadd.f32 %v1188, %v1378
        %v1417 = vadd.f32 %v1193, %v1383
        %v1418 = vadd.f32 %v1196, %v1386
        %v1419 = vadd.f32 %v1201, %v1391
        %v1420 = vadd.f32 %v1204, %v1394
        %v1421 = vadd.f32 %v1209, %v1399
        %v1422 = vadd.f32 %v1212, %v1402
        %v1423 = vadd.f32 %v1217, %v1407
        %v1424 = vadd.f32 %v1220, %v1410
        %v1426 = vlaneseq
        %v1427 = vshrl.u32 %v1426, 7
        %v1428 = vsub.s32 0, %v1427
        %v1429 = vrot.slane %v394, %v1428
        %v1431 = vadd.f32 %v1413, %v1429
        %v1432 = vadd.f32 %v1414, %v1429
        %v1433 = vadd.f32 %v1415, %v1429
        %v1434 = vadd.f32 %v1416, %v1429
        %v1435 = vadd.f32 %v1417, %v1429
        %v1436 = vadd.f32 %v1418, %v1429
        %v1437 = vadd.f32 %v1419, %v1429
        %v1438 = vadd.f32 %v1420, %v1429
        %v1439 = vadd.f32 %v1421, %v1429
        %v1440 = vadd.f32 %v1422, %v1429
        %v1441 = vadd.f32 %v1423, %v1429
        %v1442 = vadd.f32 %v1424, %v1429
        %v1443 = vmax.f32 %v1431, 0.0
        %v1444 = vmax.f32 %v1432, 0.0
        %v1445 = vmax.f32 %v1433, 0.0
        %v1446 = vmax.f32 %v1434, 0.0
        %v1447 = vmax.f32 %v1435, 0.0
        %v1448 = vmax.f32 %v1436, 0.0
        %v1449 = vmax.f32 %v1437, 0.0
        %v1450 = vmax.f32 %v1438, 0.0
        %v1451 = vmax.f32 %v1439, 0.0
        %v1452 = vmax.f32 %v1440, 0.0
        %v1453 = vmax.f32 %v1441, 0.0
        %v1454 = vmax.f32 %v1442, 0.0
        %v1455 = vpack.c.bf16 %v1444, %v1443
        %v1456 = vpack.c.bf16 %v1446, %v1445
        %v1457 = vpack.c.bf16 %v1448, %v1447
        %v1458 = vpack.c.bf16 %v1450, %v1449
        %v1459 = vpack.c.bf16 %v1452, %v1451
        %v1460 = vpack.c.bf16 %v1454, %v1453
        %v1467 = vunpack.c.l.b16 %v1455
        %v1468 = vunpack.c.h.b16 %v1455
        %v1469 = vunpack.c.l.b16 %v1456
        %v1470 = vunpack.c.h.b16 %v1456
        %v1471 = vunpack.c.l.b16 %v1457
        %v1472 = vunpack.c.h.b16 %v1457
        %v1473 = vunpack.c.l.b16 %v1458
        %v1474 = vunpack.c.h.b16 %v1458
        %v1475 = vunpack.c.l.b16 %v1459
        %v1476 = vunpack.c.h.b16 %v1459
        %v1477 = vunpack.c.l.b16 %v1460
        %v1478 = vunpack.c.h.b16 %v1460
        %v1479 = vpack.c.b16 %v1467, %v1467
        %v1480 = vpack.c.b16 %v1468, %v1468
        %v1481 = vpack.c.b16 %v1469, %v1469
        %v1482 = vpack.c.b16 %v1470, %v1470
        %v1483 = vpack.c.b16 %v1471, %v1471
        %v1484 = vpack.c.b16 %v1472, %v1472
        %v1485 = vpack.c.b16 %v1473, %v1473
        %v1486 = vpack.c.b16 %v1474, %v1474
        %v1487 = vpack.c.b16 %v1475, %v1475
        %v1488 = vpack.c.b16 %v1476, %v1476
        %v1489 = vpack.c.b16 %v1477, %v1477
        %v1490 = vpack.c.b16 %v1478, %v1478
        %1491 = vrot.lane.b32.xlu0 %v1479, 32
        %v1492 = vpop.permute.xlu0 %1491
        %1493 = vrot.lane.b32.xlu0 %v1480, 32
        %v1494 = vpop.permute.xlu0 %1493
        %1495 = vrot.lane.b32.xlu0 %v1481, 32
        %v1496 = vpop.permute.xlu0 %1495
        %1497 = vrot.lane.b32.xlu0 %v1482, 32
        %v1498 = vpop.permute.xlu0 %1497
        %1499 = vrot.lane.b32.xlu0 %v1483, 32
        %v1500 = vpop.permute.xlu0 %1499
        %1501 = vrot.lane.b32.xlu0 %v1484, 32
        %v1502 = vpop.permute.xlu0 %1501
        %1503 = vrot.lane.b32.xlu0 %v1485, 32
        %v1504 = vpop.permute.xlu0 %1503
        %1505 = vrot.lane.b32.xlu0 %v1486, 32
        %v1506 = vpop.permute.xlu0 %1505
        %1507 = vrot.lane.b32.xlu0 %v1487, 32
        %v1508 = vpop.permute.xlu0 %1507
        %1509 = vrot.lane.b32.xlu0 %v1488, 32
        %v1510 = vpop.permute.xlu0 %1509
        %1511 = vrot.lane.b32.xlu0 %v1489, 32
        %v1512 = vpop.permute.xlu0 %1511
        %1513 = vrot.lane.b32.xlu0 %v1490, 32
        %v1514 = vpop.permute.xlu0 %1513
        %1527 = vst.msk [vmem:[#allocation2] sm:$0xf] %vm568, %v1492
        %1528 = vst.msk [vmem:[#allocation2 + $0x4] sm:$0xf] %vm568, %v1494
        %1529 = vst.msk [vmem:[#allocation2 + $0x8] sm:$0xf] %vm568, %v1496
        %1530 = vst.msk [vmem:[#allocation2 + $0xc] sm:$0xf] %vm568, %v1498
        %1531 = vst.msk [vmem:[#allocation2 + $0x10] sm:$0xf] %vm568, %v1500
        %1532 = vst.msk [vmem:[#allocation2 + $0x14] sm:$0xf] %vm568, %v1502
        %1533 = vst.msk [vmem:[#allocation2 + $0x18] sm:$0xf] %vm568, %v1504
        %1534 = vst.msk [vmem:[#allocation2 + $0x1c] sm:$0xf] %vm568, %v1506
        %1535 = vst.msk [vmem:[#allocation2 + $0x20] sm:$0xf] %vm568, %v1508
        %1536 = vst.msk [vmem:[#allocation2 + $0x24] sm:$0xf] %vm568, %v1510
        %1537 = vst.msk [vmem:[#allocation2 + $0x28] sm:$0xf] %vm568, %v1512
        %1538 = vst.msk [vmem:[#allocation2 + $0x2c] sm:$0xf] %vm568, %v1514
        %v1540 = vshrl.u32 %v1455, 16
        %v1542 = vrot.slane %v1540, 7
        %v1543 = vshll.u32 %v1455, 16
        %v1545 = vor.u32 %v1542, %v1543
        %v1547 = vshrl.u32 %v1456, 16
        %v1549 = vrot.slane %v1547, 7
        %v1550 = vshll.u32 %v1456, 16
        %v1552 = vor.u32 %v1549, %v1550
        %v1554 = vshrl.u32 %v1457, 16
        %v1556 = vrot.slane %v1554, 7
        %v1557 = vshll.u32 %v1457, 16
        %v1559 = vor.u32 %v1556, %v1557
        %v1561 = vshrl.u32 %v1458, 16
        %v1563 = vrot.slane %v1561, 7
        %v1564 = vshll.u32 %v1458, 16
        %v1566 = vor.u32 %v1563, %v1564
        %v1568 = vshrl.u32 %v1459, 16
        %v1570 = vrot.slane %v1568, 7
        %v1571 = vshll.u32 %v1459, 16
        %v1573 = vor.u32 %v1570, %v1571
        %v1575 = vshrl.u32 %v1460, 16
        %v1577 = vrot.slane %v1575, 7
        %v1578 = vshll.u32 %v1460, 16
        %v1580 = vor.u32 %v1577, %v1578
        %v1587 = vsel %vm611, 0, %v1545
        %v1588 = vsel %vm611, 0, %v1552
        %v1589 = vsel %vm611, 0, %v1559
        %v1590 = vsel %vm611, 0, %v1566
        %v1591 = vsel %vm611, 0, %v1573
        %v1592 = vsel %vm611, 0, %v1580
        %v1599 = vunpack.c.l.b16 %v1587
        %v1600 = vunpack.c.h.b16 %v1587
        %v1601 = vunpack.c.l.b16 %v1588
        %v1602 = vunpack.c.h.b16 %v1588
        %v1603 = vunpack.c.l.b16 %v1589
        %v1604 = vunpack.c.h.b16 %v1589
        %v1605 = vunpack.c.l.b16 %v1590
        %v1606 = vunpack.c.h.b16 %v1590
        %v1607 = vunpack.c.l.b16 %v1591
        %v1608 = vunpack.c.h.b16 %v1591
        %v1609 = vunpack.c.l.b16 %v1592
        %v1610 = vunpack.c.h.b16 %v1592
        %v1611 = vpack.c.b16 %v1599, %v1599
        %v1612 = vpack.c.b16 %v1600, %v1600
        %v1613 = vpack.c.b16 %v1601, %v1601
        %v1614 = vpack.c.b16 %v1602, %v1602
        %v1615 = vpack.c.b16 %v1603, %v1603
        %v1616 = vpack.c.b16 %v1604, %v1604
        %v1617 = vpack.c.b16 %v1605, %v1605
        %v1618 = vpack.c.b16 %v1606, %v1606
        %v1619 = vpack.c.b16 %v1607, %v1607
        %v1620 = vpack.c.b16 %v1608, %v1608
        %v1621 = vpack.c.b16 %v1609, %v1609
        %v1622 = vpack.c.b16 %v1610, %v1610
        %1635 = vst.msk [vmem:[#allocation2] sm:$0xf] %vm644, %v1611
        %1636 = vst.msk [vmem:[#allocation2 + $0x4] sm:$0xf] %vm644, %v1612
        %1637 = vst.msk [vmem:[#allocation2 + $0x8] sm:$0xf] %vm644, %v1613
        %1638 = vst.msk [vmem:[#allocation2 + $0xc] sm:$0xf] %vm644, %v1614
        %1639 = vst.msk [vmem:[#allocation2 + $0x10] sm:$0xf] %vm644, %v1615
        %1640 = vst.msk [vmem:[#allocation2 + $0x14] sm:$0xf] %vm644, %v1616
        %1641 = vst.msk [vmem:[#allocation2 + $0x18] sm:$0xf] %vm644, %v1617
        %1642 = vst.msk [vmem:[#allocation2 + $0x1c] sm:$0xf] %vm644, %v1618
        %1643 = vst.msk [vmem:[#allocation2 + $0x20] sm:$0xf] %vm644, %v1619
        %1644 = vst.msk [vmem:[#allocation2 + $0x24] sm:$0xf] %vm644, %v1620
        %1645 = vst.msk [vmem:[#allocation2 + $0x28] sm:$0xf] %vm644, %v1621
        %1646 = vst.msk [vmem:[#allocation2 + $0x2c] sm:$0xf] %vm644, %v1622
        %v1647 = vrot.slane %v1543, 1
        %v1648 = vor.u32 %v1540, %v1647
        %v1649 = vrot.slane %v1550, 1
        %v1650 = vor.u32 %v1547, %v1649
        %v1651 = vrot.slane %v1557, 1
        %v1652 = vor.u32 %v1554, %v1651
        %v1653 = vrot.slane %v1564, 1
        %v1654 = vor.u32 %v1561, %v1653
        %v1655 = vrot.slane %v1571, 1
        %v1656 = vor.u32 %v1568, %v1655
        %v1657 = vrot.slane %v1578, 1
        %v1658 = vor.u32 %v1575, %v1657
        %v1665 = vsel %vm667, %v1648, 0
        %v1666 = vsel %vm667, %v1650, 0
        %v1667 = vsel %vm667, %v1652, 0
        %v1668 = vsel %vm667, %v1654, 0
        %v1669 = vsel %vm667, %v1656, 0
        %v1670 = vsel %vm667, %v1658, 0
        %v1677 = vunpack.c.l.b16 %v1665
        %v1678 = vunpack.c.h.b16 %v1665
        %v1679 = vunpack.c.l.b16 %v1666
        %v1680 = vunpack.c.h.b16 %v1666
        %v1681 = vunpack.c.l.b16 %v1667
        %v1682 = vunpack.c.h.b16 %v1667
        %v1683 = vunpack.c.l.b16 %v1668
        %v1684 = vunpack.c.h.b16 %v1668
        %v1685 = vunpack.c.l.b16 %v1669
        %v1686 = vunpack.c.h.b16 %v1669
        %v1687 = vunpack.c.l.b16 %v1670
        %v1688 = vunpack.c.h.b16 %v1670
        %v1689 = vpack.c.b16 %v1677, %v1677
        %v1690 = vpack.c.b16 %v1678, %v1678
        %v1691 = vpack.c.b16 %v1679, %v1679
        %v1692 = vpack.c.b16 %v1680, %v1680
        %v1693 = vpack.c.b16 %v1681, %v1681
        %v1694 = vpack.c.b16 %v1682, %v1682
        %v1695 = vpack.c.b16 %v1683, %v1683
        %v1696 = vpack.c.b16 %v1684, %v1684
        %v1697 = vpack.c.b16 %v1685, %v1685
        %v1698 = vpack.c.b16 %v1686, %v1686
        %v1699 = vpack.c.b16 %v1687, %v1687
        %v1700 = vpack.c.b16 %v1688, %v1688
        %1701 = vrot.lane.b32.xlu0 %v1689, 64
        %v1702 = vpop.permute.xlu0 %1701
        %1703 = vrot.lane.b32.xlu0 %v1690, 64
        %v1704 = vpop.permute.xlu0 %1703
        %1705 = vrot.lane.b32.xlu0 %v1691, 64
        %v1706 = vpop.permute.xlu0 %1705
        %1707 = vrot.lane.b32.xlu0 %v1692, 64
        %v1708 = vpop.permute.xlu0 %1707
        %1709 = vrot.lane.b32.xlu0 %v1693, 64
        %v1710 = vpop.permute.xlu0 %1709
        %1711 = vrot.lane.b32.xlu0 %v1694, 64
        %v1712 = vpop.permute.xlu0 %1711
        %1713 = vrot.lane.b32.xlu0 %v1695, 64
        %v1714 = vpop.permute.xlu0 %1713
        %1715 = vrot.lane.b32.xlu0 %v1696, 64
        %v1716 = vpop.permute.xlu0 %1715
        %1717 = vrot.lane.b32.xlu0 %v1697, 64
        %v1718 = vpop.permute.xlu0 %1717
        %1719 = vrot.lane.b32.xlu0 %v1698, 64
        %v1720 = vpop.permute.xlu0 %1719
        %1721 = vrot.lane.b32.xlu0 %v1699, 64
        %v1722 = vpop.permute.xlu0 %1721
        %1723 = vrot.lane.b32.xlu0 %v1700, 64
        %v1724 = vpop.permute.xlu0 %1723
        %1737 = vst.msk [vmem:[#allocation2] sm:$0xf] %vm716, %v1702
        %1738 = vst.msk [vmem:[#allocation2 + $0x4] sm:$0xf] %vm716, %v1704
        %1739 = vst.msk [vmem:[#allocation2 + $0x8] sm:$0xf] %vm716, %v1706
        %1740 = vst.msk [vmem:[#allocation2 + $0xc] sm:$0xf] %vm716, %v1708
        %1741 = vst.msk [vmem:[#allocation2 + $0x10] sm:$0xf] %vm716, %v1710
        %1742 = vst.msk [vmem:[#allocation2 + $0x14] sm:$0xf] %vm716, %v1712
        %1743 = vst.msk [vmem:[#allocation2 + $0x18] sm:$0xf] %vm716, %v1714
        %1744 = vst.msk [vmem:[#allocation2 + $0x1c] sm:$0xf] %vm716, %v1716
        %1745 = vst.msk [vmem:[#allocation2 + $0x20] sm:$0xf] %vm716, %v1718
        %1746 = vst.msk [vmem:[#allocation2 + $0x24] sm:$0xf] %vm716, %v1720
        %1747 = vst.msk [vmem:[#allocation2 + $0x28] sm:$0xf] %vm716, %v1722
        %1748 = vst.msk [vmem:[#allocation2 + $0x2c] sm:$0xf] %vm716, %v1724
        // Predicated region
        $region69: #{tpu_custom_call.1} parent=39 // pred_check
          %p1749 = pneg %p395
        $region70: #{tpu_custom_call.1} parent=39 // pred_check_branch
          %1751 = sbr.rel (%p1749) target = $region72
        $region71: #{tpu_custom_call.1} parent=39 // pred_region
          %vm1752 = vcmask 781312
          %1753 = vst.msk [vmem:[#allocation2] sm:$0xf] %vm1752, 0
          %1754 = vst.msk [vmem:[#allocation2 + $0x4] sm:$0xf] %vm1752, 0
        $region72: #{tpu_custom_call.1} parent=39 // pred_fallthru
          _
        // Predicated region
        $region73: #{tpu_custom_call.1} parent=39 // pred_check
          %p1755 = pneg %p725
        $region74: #{tpu_custom_call.1} parent=39 // pred_check_branch
          %1757 = sbr.rel (%p1755) target = $region76
        $region75: #{tpu_custom_call.1} parent=39 // pred_region
          %s1758 = scalar_lea.vmem [#allocation2], 40
          %vm1759 = vcmask 781312
          %1760 = vst.msk [vmem:[%s1758] sm:$0xf] %vm1759, 0
          %1761 = vst.msk [vmem:[%s1758 + $0x4] sm:$0xf] %vm1759, 0
        $region76: #{tpu_custom_call.1} parent=39 // pred_fallthru
          _
        %v1762 = vld [vmem:[#allocation2] sm:$0xf]
        %v1763 = vld [vmem:[#allocation2 + $0x4] sm:$0xf]
        %v1764 = vld [vmem:[#allocation2 + $0x8] sm:$0xf]
        %v1765 = vld [vmem:[#allocation2 + $0xc] sm:$0xf]
        %v1766 = vld [vmem:[#allocation2 + $0x10] sm:$0xf]
        %v1767 = vld [vmem:[#allocation2 + $0x14] sm:$0xf]
        %v1768 = vld [vmem:[#allocation2 + $0x18] sm:$0xf]
        %v1769 = vld [vmem:[#allocation2 + $0x1c] sm:$0xf]
        %v1770 = vld [vmem:[%s3] sm:$0xf]
        %v1771 = vld [vmem:[%s3 + $0x4] sm:$0xf]
        %v1772 = vld [vmem:[%s3 + $0x8] sm:$0xf]
        %v1773 = vld [vmem:[%s3 + $0xc] sm:$0xf]
        %v1774 = vld [vmem:[%s3 + $0x10] sm:$0xf]
        %v1775 = vld [vmem:[%s3 + $0x14] sm:$0xf]
        %v1776 = vld [vmem:[%s3 + $0x18] sm:$0xf]
        %v1777 = vld [vmem:[%s3 + $0x1c] sm:$0xf]
        %v1778 = vld [vmem:[%s3 + $0x20] sm:$0xf]
        %v1779 = vld [vmem:[%s3 + $0x24] sm:$0xf]
        %v1780 = vld [vmem:[%s3 + $0x28] sm:$0xf]
        %v1781 = vld [vmem:[%s3 + $0x2c] sm:$0xf]
        %v1782 = vld [vmem:[%s866] sm:$0xf]
        %v1783 = vld [vmem:[%s866 + $0x4] sm:$0xf]
        %v1784 = vld [vmem:[%s866 + $0x8] sm:$0xf]
        %v1785 = vld [vmem:[%s866 + $0xc] sm:$0xf]
        %v1786 = vld [vmem:[%s866 + $0x10] sm:$0xf]
        %v1787 = vld [vmem:[%s866 + $0x14] sm:$0xf]
        %v1788 = vld [vmem:[%s866 + $0x18] sm:$0xf]
        %v1789 = vld [vmem:[%s866 + $0x1c] sm:$0xf]
        %v1790 = vld [vmem:[%s879] sm:$0xf]
        %v1791 = vld [vmem:[%s879 + $0x4] sm:$0xf]
        %v1792 = vld [vmem:[%s879 + $0x8] sm:$0xf]
        %v1793 = vld [vmem:[%s879 + $0xc] sm:$0xf]
        %v1794 = vld [vmem:[%s879 + $0x10] sm:$0xf]
        %v1795 = vld [vmem:[%s879 + $0x14] sm:$0xf]
        %v1796 = vld [vmem:[%s879 + $0x18] sm:$0xf]
        %v1797 = vld [vmem:[%s879 + $0x1c] sm:$0xf]
        %v1798 = vld [vmem:[%s879 + $0x20] sm:$0xf]
        %v1799 = vld [vmem:[%s879 + $0x24] sm:$0xf]
        %v1800 = vld [vmem:[%s879 + $0x28] sm:$0xf]
        %v1801 = vld [vmem:[%s879 + $0x2c] sm:$0xf]
        %v1810 = vunpack.c.l.b16 %v1782
        %v1811 = vunpack.c.l.b16 %v1783
        %v1812 = vunpack.c.l.b16 %v1784
        %v1813 = vunpack.c.l.b16 %v1785
        %v1814 = vunpack.c.l.b16 %v1786
        %v1815 = vunpack.c.l.b16 %v1787
        %v1816 = vunpack.c.l.b16 %v1788
        %v1817 = vunpack.c.l.b16 %v1789
        %v1818 = vpack.c.b16 %v1811, %v1810
        %v1819 = vpack.c.b16 %v1813, %v1812
        %v1820 = vpack.c.b16 %v1815, %v1814
        %v1821 = vpack.c.b16 %v1817, %v1816
        %v1834 = vunpack.c.l.b16 %v1790
        %v1835 = vunpack.c.l.b16 %v1791
        %v1836 = vunpack.c.l.b16 %v1792
        %v1837 = vunpack.c.l.b16 %v1793
        %v1838 = vunpack.c.l.b16 %v1794
        %v1839 = vunpack.c.l.b16 %v1795
        %v1840 = vunpack.c.l.b16 %v1796
        %v1841 = vunpack.c.l.b16 %v1797
        %v1842 = vunpack.c.l.b16 %v1798
        %v1843 = vunpack.c.l.b16 %v1799
        %v1844 = vunpack.c.l.b16 %v1800
        %v1845 = vunpack.c.l.b16 %v1801
        %v1846 = vpack.c.b16 %v1835, %v1834
        %v1847 = vpack.c.b16 %v1837, %v1836
        %v1848 = vpack.c.b16 %v1839, %v1838
        %v1849 = vpack.c.b16 %v1841, %v1840
        %v1850 = vpack.c.b16 %v1843, %v1842
        %v1851 = vpack.c.b16 %v1845, %v1844
        %v1859 = vsel %vm958, %v1818, 0
        %v1862 = vsel %vm958, %v1819, 0
        %v1865 = vsel %vm958, %v1820, 0
        %v1868 = vsel %vm958, %v1821, 0
        %1870 = vmatprep.subr.bf16.mxu0 0
        %1871 = vmatpush1.bf16.msra.mxu0 0
        %1872 = vmatprep.subr.bf16.mxu0 0
        %1873 = vmatpush1.bf16.msra.mxu0 0
        %1874 = vmatprep.subr.bf16.mxu0 0
        %1875 = vmatpush1.bf16.msra.mxu0 %v1851
        %1876 = vmatprep.subr.bf16.mxu0 0
        %1877 = vmatpush1.bf16.msra.mxu0 %v1850
        %1878 = vmatprep.subr.bf16.mxu0 0
        %1879 = vmatpush1.bf16.msra.mxu0 %v1849
        %1880 = vmatprep.subr.bf16.mxu0 0
        %1881 = vmatpush1.bf16.msra.mxu0 %v1848
        %1882 = vmatprep.subr.bf16.mxu0 0
        %1883 = vmatpush1.bf16.msra.mxu0 %v1847
        %1884 = vmatprep.subr.bf16.mxu0 0
        %1885 = vmatpush1.bf16.msra.mxu0 %v1846
        %1886 = vmatprep.subr.bf16.mxu0 0
        %1887 = vmatpush2.bf16.msra.mxu0 0
        %1888 = vmatprep.subr.bf16.mxu0 0
        %1889 = vmatpush2.bf16.msra.mxu0 0
        %1890 = vmatprep.subr.bf16.mxu0 0
        %1891 = vmatpush2.bf16.msra.mxu0 0
        %1892 = vmatprep.subr.bf16.mxu0 0
        %1893 = vmatpush2.bf16.msra.mxu0 0
        %1894 = vmatprep.subr.bf16.mxu0 0
        %1895 = vmatpush2.bf16.msra.mxu0 0
        %1896 = vmatprep.subr.bf16.mxu0 0
        %1897 = vmatpush2.bf16.msra.mxu0 0
        %1898 = vmatprep.subr.bf16.mxu0 0
        %1899 = vmatpush2.bf16.msra.mxu0 0
        %1900 = vmatprep.subr.bf16.mxu0 0
        %1901 = vmatpush2.bf16.msra.mxu0 0
        %1902 = vmatprep.mubr.bf16.mxu0 0
        %1903 = vmatmul.mubr.bf16.gmra.mxu0 %v1859
        %v1904 = vpop.f32.mrf.mxu0
        %v1905 = vadd.f32 0.0, %v1904
        %v1906 = vpop.f32.mrf.mxu0
        %v1907 = vpop.f32.mrf.mxu0
        %v1908 = vadd.f32 0.0, %v1907
        %v1909 = vpop.f32.mrf.mxu0
        %1910 = vmatprep.mubr.bf16.mxu0 0
        %1911 = vmatmul.mubr.bf16.gmra.mxu0 %v1862
        %v1912 = vpop.f32.mrf.mxu0
        %v1913 = vadd.f32 0.0, %v1912
        %v1914 = vpop.f32.mrf.mxu0
        %v1915 = vpop.f32.mrf.mxu0
        %v1916 = vadd.f32 0.0, %v1915
        %v1917 = vpop.f32.mrf.mxu0
        %1918 = vmatprep.mubr.bf16.mxu0 0
        %1919 = vmatmul.mubr.bf16.gmra.mxu0 %v1865
        %v1920 = vpop.f32.mrf.mxu0
        %v1921 = vadd.f32 0.0, %v1920
        %v1922 = vpop.f32.mrf.mxu0
        %v1923 = vpop.f32.mrf.mxu0
        %v1924 = vadd.f32 0.0, %v1923
        %v1925 = vpop.f32.mrf.mxu0
        %1926 = vmatprep.mubr.bf16.mxu0 0
        %1927 = vmatmul.mubr.bf16.gmra.mxu0 %v1868
        %v1928 = vpop.f32.mrf.mxu0
        %v1929 = vadd.f32 0.0, %v1928
        %v1930 = vpop.f32.mrf.mxu0
        %v1931 = vpop.f32.mrf.mxu0
        %v1932 = vadd.f32 0.0, %v1931
        %v1933 = vpop.f32.mrf.mxu0
        %1934 = vdwg.mxu0
        %v1943 = vunpack.c.l.b16 %v1762
        %v1944 = vunpack.c.l.b16 %v1763
        %v1945 = vunpack.c.l.b16 %v1764
        %v1946 = vunpack.c.l.b16 %v1765
        %v1947 = vunpack.c.l.b16 %v1766
        %v1948 = vunpack.c.l.b16 %v1767
        %v1949 = vunpack.c.l.b16 %v1768
        %v1950 = vunpack.c.l.b16 %v1769
        %v1951 = vpack.c.b16 %v1944, %v1943
        %v1952 = vpack.c.b16 %v1946, %v1945
        %v1953 = vpack.c.b16 %v1948, %v1947
        %v1954 = vpack.c.b16 %v1950, %v1949
        %v1967 = vunpack.c.l.b16 %v1770
        %v1968 = vunpack.c.l.b16 %v1771
        %v1969 = vunpack.c.l.b16 %v1772
        %v1970 = vunpack.c.l.b16 %v1773
        %v1971 = vunpack.c.l.b16 %v1774
        %v1972 = vunpack.c.l.b16 %v1775
        %v1973 = vunpack.c.l.b16 %v1776
        %v1974 = vunpack.c.l.b16 %v1777
        %v1975 = vunpack.c.l.b16 %v1778
        %v1976 = vunpack.c.l.b16 %v1779
        %v1977 = vunpack.c.l.b16 %v1780
        %v1978 = vunpack.c.l.b16 %v1781
        %v1979 = vpack.c.b16 %v1968, %v1967
        %v1980 = vpack.c.b16 %v1970, %v1969
        %v1981 = vpack.c.b16 %v1972, %v1971
        %v1982 = vpack.c.b16 %v1974, %v1973
        %v1983 = vpack.c.b16 %v1976, %v1975
        %v1984 = vpack.c.b16 %v1978, %v1977
        %v1992 = vsel %vm958, %v1951, 0
        %v1995 = vsel %vm958, %v1952, 0
        %v1998 = vsel %vm958, %v1953, 0
        %v2001 = vsel %vm958, %v1954, 0
        %2003 = vmatprep.subr.bf16.mxu0 0
        %2004 = vmatpush1.bf16.msra.mxu0 0
        %2005 = vmatprep.subr.bf16.mxu0 0
        %2006 = vmatpush1.bf16.msra.mxu0 0
        %2007 = vmatprep.subr.bf16.mxu0 0
        %2008 = vmatpush1.bf16.msra.mxu0 %v1984
        %2009 = vmatprep.subr.bf16.mxu0 0
        %2010 = vmatpush1.bf16.msra.mxu0 %v1983
        %2011 = vmatprep.subr.bf16.mxu0 0
        %2012 = vmatpush1.bf16.msra.mxu0 %v1982
        %2013 = vmatprep.subr.bf16.mxu0 0
        %2014 = vmatpush1.bf16.msra.mxu0 %v1981
        %2015 = vmatprep.subr.bf16.mxu0 0
        %2016 = vmatpush1.bf16.msra.mxu0 %v1980
        %2017 = vmatprep.subr.bf16.mxu0 0
        %2018 = vmatpush1.bf16.msra.mxu0 %v1979
        %2019 = vmatprep.subr.bf16.mxu0 0
        %2020 = vmatpush2.bf16.msra.mxu0 0
        %2021 = vmatprep.subr.bf16.mxu0 0
        %2022 = vmatpush2.bf16.msra.mxu0 0
        %2023 = vmatprep.subr.bf16.mxu0 0
        %2024 = vmatpush2.bf16.msra.mxu0 0
        %2025 = vmatprep.subr.bf16.mxu0 0
        %2026 = vmatpush2.bf16.msra.mxu0 0
        %2027 = vmatprep.subr.bf16.mxu0 0
        %2028 = vmatpush2.bf16.msra.mxu0 0
        %2029 = vmatprep.subr.bf16.mxu0 0
        %2030 = vmatpush2.bf16.msra.mxu0 0
        %2031 = vmatprep.subr.bf16.mxu0 0
        %2032 = vmatpush2.bf16.msra.mxu0 0
        %2033 = vmatprep.subr.bf16.mxu0 0
        %2034 = vmatpush2.bf16.msra.mxu0 0
        %2035 = vmatprep.mubr.bf16.mxu0 0
        %2036 = vmatmul.mubr.bf16.gmra.mxu0 %v1992
        %v2037 = vpop.f32.mrf.mxu0
        %v2038 = vadd.f32 %v1905, %v2037
        %v2039 = vpop.f32.mrf.mxu0
        %v2040 = vpop.f32.mrf.mxu0
        %v2041 = vadd.f32 %v1908, %v2040
        %v2042 = vpop.f32.mrf.mxu0
        %2043 = vmatprep.mubr.bf16.mxu0 0
        %2044 = vmatmul.mubr.bf16.gmra.mxu0 %v1995
        %v2045 = vpop.f32.mrf.mxu0
        %v2046 = vadd.f32 %v1913, %v2045
        %v2047 = vpop.f32.mrf.mxu0
        %v2048 = vpop.f32.mrf.mxu0
        %v2049 = vadd.f32 %v1916, %v2048
        %v2050 = vpop.f32.mrf.mxu0
        %2051 = vmatprep.mubr.bf16.mxu0 0
        %2052 = vmatmul.mubr.bf16.gmra.mxu0 %v1998
        %v2053 = vpop.f32.mrf.mxu0
        %v2054 = vadd.f32 %v1921, %v2053
        %v2055 = vpop.f32.mrf.mxu0
        %v2056 = vpop.f32.mrf.mxu0
        %v2057 = vadd.f32 %v1924, %v2056
        %v2058 = vpop.f32.mrf.mxu0
        %2059 = vmatprep.mubr.bf16.mxu0 0
        %2060 = vmatmul.mubr.bf16.gmra.mxu0 %v2001
        %v2061 = vpop.f32.mrf.mxu0
        %v2062 = vadd.f32 %v1929, %v2061
        %v2063 = vpop.f32.mrf.mxu0
        %v2064 = vpop.f32.mrf.mxu0
        %v2065 = vadd.f32 %v1932, %v2064
        %v2066 = vpop.f32.mrf.mxu0
        %2067 = vdwg.mxu0
        %v2068 = vld [vmem:[%s567] sm:$0xf]
        %v2069 = vld [vmem:[%s567 + $0x4] sm:$0xf]
        %v2070 = vld [vmem:[%s567 + $0x8] sm:$0xf]
        %v2071 = vld [vmem:[%s567 + $0xc] sm:$0xf]
        %v2072 = vld [vmem:[%s567 + $0x10] sm:$0xf]
        %v2073 = vld [vmem:[%s567 + $0x14] sm:$0xf]
        %v2074 = vld [vmem:[%s567 + $0x18] sm:$0xf]
        %v2075 = vld [vmem:[%s567 + $0x1c] sm:$0xf]
        %v2076 = vld [vmem:[%s1235] sm:$0xf]
        %v2077 = vld [vmem:[%s1235 + $0x4] sm:$0xf]
        %v2078 = vld [vmem:[%s1235 + $0x8] sm:$0xf]
        %v2079 = vld [vmem:[%s1235 + $0xc] sm:$0xf]
        %v2080 = vld [vmem:[%s1235 + $0x10] sm:$0xf]
        %v2081 = vld [vmem:[%s1235 + $0x14] sm:$0xf]
        %v2082 = vld [vmem:[%s1235 + $0x18] sm:$0xf]
        %v2083 = vld [vmem:[%s1235 + $0x1c] sm:$0xf]
        %v2084 = vld [vmem:[%s1235 + $0x20] sm:$0xf]
        %v2085 = vld [vmem:[%s1235 + $0x24] sm:$0xf]
        %v2086 = vld [vmem:[%s1235 + $0x28] sm:$0xf]
        %v2087 = vld [vmem:[%s1235 + $0x2c] sm:$0xf]
        %v2096 = vunpack.c.l.b16 %v2068
        %v2097 = vunpack.c.l.b16 %v2069
        %v2098 = vunpack.c.l.b16 %v2070
        %v2099 = vunpack.c.l.b16 %v2071
        %v2100 = vunpack.c.l.b16 %v2072
        %v2101 = vunpack.c.l.b16 %v2073
        %v2102 = vunpack.c.l.b16 %v2074
        %v2103 = vunpack.c.l.b16 %v2075
        %v2104 = vpack.c.b16 %v2097, %v2096
        %v2105 = vpack.c.b16 %v2099, %v2098
        %v2106 = vpack.c.b16 %v2101, %v2100
        %v2107 = vpack.c.b16 %v2103, %v2102
        %v2120 = vunpack.c.l.b16 %v2076
        %v2121 = vunpack.c.l.b16 %v2077
        %v2122 = vunpack.c.l.b16 %v2078
        %v2123 = vunpack.c.l.b16 %v2079
        %v2124 = vunpack.c.l.b16 %v2080
        %v2125 = vunpack.c.l.b16 %v2081
        %v2126 = vunpack.c.l.b16 %v2082
        %v2127 = vunpack.c.l.b16 %v2083
        %v2128 = vunpack.c.l.b16 %v2084
        %v2129 = vunpack.c.l.b16 %v2085
        %v2130 = vunpack.c.l.b16 %v2086
        %v2131 = vunpack.c.l.b16 %v2087
        %v2132 = vpack.c.b16 %v2121, %v2120
        %v2133 = vpack.c.b16 %v2123, %v2122
        %v2134 = vpack.c.b16 %v2125, %v2124
        %v2135 = vpack.c.b16 %v2127, %v2126
        %v2136 = vpack.c.b16 %v2129, %v2128
        %v2137 = vpack.c.b16 %v2131, %v2130
        %v2145 = vsel %vm958, %v2104, 0
        %v2148 = vsel %vm958, %v2105, 0
        %v2151 = vsel %vm958, %v2106, 0
        %v2154 = vsel %vm958, %v2107, 0
        %2156 = vmatprep.subr.bf16.mxu0 0
        %2157 = vmatpush1.bf16.msra.mxu0 0
        %2158 = vmatprep.subr.bf16.mxu0 0
        %2159 = vmatpush1.bf16.msra.mxu0 0
        %2160 = vmatprep.subr.bf16.mxu0 0
        %2161 = vmatpush1.bf16.msra.mxu0 %v2137
        %2162 = vmatprep.subr.bf16.mxu0 0
        %2163 = vmatpush1.bf16.msra.mxu0 %v2136
        %2164 = vmatprep.subr.bf16.mxu0 0
        %2165 = vmatpush1.bf16.msra.mxu0 %v2135
        %2166 = vmatprep.subr.bf16.mxu0 0
        %2167 = vmatpush1.bf16.msra.mxu0 %v2134
        %2168 = vmatprep.subr.bf16.mxu0 0
        %2169 = vmatpush1.bf16.msra.mxu0 %v2133
        %2170 = vmatprep.subr.bf16.mxu0 0
        %2171 = vmatpush1.bf16.msra.mxu0 %v2132
        %2172 = vmatprep.subr.bf16.mxu0 0
        %2173 = vmatpush2.bf16.msra.mxu0 0
        %2174 = vmatprep.subr.bf16.mxu0 0
        %2175 = vmatpush2.bf16.msra.mxu0 0
        %2176 = vmatprep.subr.bf16.mxu0 0
        %2177 = vmatpush2.bf16.msra.mxu0 0
        %2178 = vmatprep.subr.bf16.mxu0 0
        %2179 = vmatpush2.bf16.msra.mxu0 0
        %2180 = vmatprep.subr.bf16.mxu0 0
        %2181 = vmatpush2.bf16.msra.mxu0 0
        %2182 = vmatprep.subr.bf16.mxu0 0
        %2183 = vmatpush2.bf16.msra.mxu0 0
        %2184 = vmatprep.subr.bf16.mxu0 0
        %2185 = vmatpush2.bf16.msra.mxu0 0
        %2186 = vmatprep.subr.bf16.mxu0 0
        %2187 = vmatpush2.bf16.msra.mxu0 0
        %2188 = vmatprep.mubr.bf16.mxu0 0
        %2189 = vmatmul.mubr.bf16.gmra.mxu0 %v2145
        %v2190 = vpop.f32.mrf.mxu0
        %v2191 = vadd.f32 0.0, %v2190
        %v2192 = vpop.f32.mrf.mxu0
        %v2193 = vpop.f32.mrf.mxu0
        %v2194 = vadd.f32 0.0, %v2193
        %v2195 = vpop.f32.mrf.mxu0
        %2196 = vmatprep.mubr.bf16.mxu0 0
        %2197 = vmatmul.mubr.bf16.gmra.mxu0 %v2148
        %v2198 = vpop.f32.mrf.mxu0
        %v2199 = vadd.f32 0.0, %v2198
        %v2200 = vpop.f32.mrf.mxu0
        %v2201 = vpop.f32.mrf.mxu0
        %v2202 = vadd.f32 0.0, %v2201
        %v2203 = vpop.f32.mrf.mxu0
        %2204 = vmatprep.mubr.bf16.mxu0 0
        %2205 = vmatmul.mubr.bf16.gmra.mxu0 %v2151
        %v2206 = vpop.f32.mrf.mxu0
        %v2207 = vadd.f32 0.0, %v2206
        %v2208 = vpop.f32.mrf.mxu0
        %v2209 = vpop.f32.mrf.mxu0
        %v2210 = vadd.f32 0.0, %v2209
        %v2211 = vpop.f32.mrf.mxu0
        %2212 = vmatprep.mubr.bf16.mxu0 0
        %2213 = vmatmul.mubr.bf16.gmra.mxu0 %v2154
        %v2214 = vpop.f32.mrf.mxu0
        %v2215 = vadd.f32 0.0, %v2214
        %v2216 = vpop.f32.mrf.mxu0
        %v2217 = vpop.f32.mrf.mxu0
        %v2218 = vadd.f32 0.0, %v2217
        %v2219 = vpop.f32.mrf.mxu0
        %2220 = vdwg.mxu0
        %v2221 = vadd.f32 %v2038, %v2191
        %v2222 = vadd.f32 %v2041, %v2194
        %v2223 = vadd.f32 %v2046, %v2199
        %v2224 = vadd.f32 %v2049, %v2202
        %v2225 = vadd.f32 %v2054, %v2207
        %v2226 = vadd.f32 %v2057, %v2210
        %v2227 = vadd.f32 %v2062, %v2215
        %v2228 = vadd.f32 %v2065, %v2218
        %v2229 = vadd.f32 %v2221, %v1429
        %v2230 = vadd.f32 %v2222, %v1429
        %v2231 = vadd.f32 %v2223, %v1429
        %v2232 = vadd.f32 %v2224, %v1429
        %v2233 = vadd.f32 %v2225, %v1429
        %v2234 = vadd.f32 %v2226, %v1429
        %v2235 = vadd.f32 %v2227, %v1429
        %v2236 = vadd.f32 %v2228, %v1429
        %v2237 = vmul.f32 %v2229, 0.1
        %v2238 = vmul.f32 %v2230, 0.1
        %v2239 = vmul.f32 %v2231, 0.1
        %v2240 = vmul.f32 %v2232, 0.1
        %v2241 = vmul.f32 %v2233, 0.1
        %v2242 = vmul.f32 %v2234, 0.1
        %v2243 = vmul.f32 %v2235, 0.1
        %v2244 = vmul.f32 %v2236, 0.1
        %v2245 = vadd.f32 %v2237, %v386
        %v2246 = vadd.f32 %v2238, %v387
        %v2247 = vadd.f32 %v2239, %v388
        %v2248 = vadd.f32 %v2240, %v389
        %v2249 = vadd.f32 %v2241, %v390
        %v2250 = vadd.f32 %v2242, %v391
        %v2251 = vadd.f32 %v2243, %v392
        %v2252 = vadd.f32 %v2244, %v393
        %vm2253 = vcmask 261120
        %2254 = vst.msk [vmem:[%s372] sm:$0xff] %vm2253, %v2245
        %2255 = vst.msk [vmem:[%s372 + $0x8] sm:$0xff] %vm2253, %v2246
        %2256 = vst.msk [vmem:[%s372 + $0x10] sm:$0xff] %vm2253, %v2247
        %2257 = vst.msk [vmem:[%s372 + $0x18] sm:$0xff] %vm2253, %v2248
        %2258 = vst.msk [vmem:[%s372 + $0x20] sm:$0xff] %vm2253, %v2249
        %2259 = vst.msk [vmem:[%s372 + $0x28] sm:$0xff] %vm2253, %v2250
        %2260 = vst.msk [vmem:[%s372 + $0x30] sm:$0xff] %vm2253, %v2251
        %2261 = vst.msk [vmem:[%s372 + $0x38] sm:$0xff] %vm2253, %v2252
        %s2262 = sand.u32 %s189, 1
        %s2263 = scalar_lea.sflag [#allocation5], %s2262
        %s2264 = sand.u32 %s189, 1
        %s2265 = smul.addr %s2264, 64
        %s2266 = scalar_lea.vmem [#allocation9], %s2265
        // Predicated region
        $region77: #{tpu_custom_call.1} parent=39 // pred_check
          %p2267 = pneg %p199
        $region78: #{tpu_custom_call.1} parent=39 // pred_check_branch
          %2269 = sbr.rel (%p2267) target = $region80
        $region79: #{tpu_custom_call.1} parent=39 // pred_region
          %s2270 = smul.u32 4, %s30
          %s2272 = ssub.s32 1024, 1024
          %2273 = vsyncadd %s2263, %s2272
          %s2274 = smul.addr %s2270, 2
          %s2275 = smul.addr %s29, 32
          %s2276 = sadd.s32 %s2274, %s2275
          %s2277 = smul.addr %s2276, 128
          %s2278 = scalar_lea.hbm %s5, %s2277
          %s2279 = sshll.u32 %s2266, 4
          %s2280 = int_to_ptr.vmem [resolvable:$true] %s2279
          %2285 = dma.vmem_to_hbm [thread:$0]  %s2280, 1024, %s2278, %s2263, 128, 128, 8
        $region80: #{tpu_custom_call.1} parent=39 // pred_fallthru
          _
      $region40: #{tpu_custom_call.1} parent=5 // pred_fallthru
        _
      %p2286 = scmp.le.s32.totalorder 2, %s20
      // Predicated region
      $region81: #{tpu_custom_call.1} parent=5 // pred_check
        %p2287 = pneg %p2286
      $region82: #{tpu_custom_call.1} parent=5 // pred_check_branch
        %2289 = sbr.rel (%p2287) target = $region84
      $region83: #{tpu_custom_call.1} parent=5 // pred_region
        %s2290 = ssub.s32 %s20, 2
        // Predicated region
        $region85: #{tpu_custom_call.1} parent=83 // pred_check
          %p2291 = pneg %p205
        $region86: #{tpu_custom_call.1} parent=83 // pred_check_branch
          %2293 = sbr.rel (%p2291) target = $region88
        $region87: #{tpu_custom_call.1} parent=83 // pred_region
          %s2294 = sand.u32 %s190, 1
          %s2295 = scalar_lea.sflag [#allocation5], %s2294
          %s2296 = sand.u32 %s190, 1
          %s2297 = smul.addr %s2296, 64
          %s2298 = scalar_lea.vmem [#allocation9], %s2297
          %2299 = dma.done %s2295, 1024
        $region88: #{tpu_custom_call.1} parent=83 // pred_fallthru
          _
      $region84: #{tpu_custom_call.1} parent=5 // pred_fallthru
        _
    $region6: #{tpu_custom_call.1} parent=1 // loop_footer
      %s24 = sadd.s32 1, %s20
    $region7: #{tpu_custom_call.1} parent=1 // loop_footer_branch
      %19 = sbr.rel target = $region3
    $region8: #{tpu_custom_call.1} parent=1 // loop_exit
      _
    %2300 = vsyncpa [#allocation4], 1
    %s2301 = scalar_lea.sflag [#allocation4], 1
    %2302 = vsyncpa %s2301, 1
    %2303 = vsyncpa [#allocation7], 1
    %s2304 = scalar_lea.sflag [#allocation7], 1
    %2305 = vsyncpa %s2304, 1
    %2306 = vsyncpa [#allocation5], 1
    %s2307 = scalar_lea.sflag [#allocation5], 1
    %2308 = vsyncpa %s2307, 1

</llo_original>
